<compile_context>
chip_gen: v5e
topology: v5e:2x2
jax: 0.10.0
libtpu: 0.0.40
codegen_flags: <defaults>
</compile_context>

<pallas_src>
import jax
import jax.numpy as jnp
import numpy as np
from jax.experimental import pallas as pl
from jax.experimental.pallas import tpu as pltpu


# ----------------------------- Pallas kernel --------------------------------

def _ms_cam_fused(z_f32, cam, w1_ref, b1_ref, w2_ref, b2_ref):
    """Fused MS_CAM on a (TB, dim) slab.  cam in {0, 1} selects cam1/cam2.

    Local + global branches are a single (dim, 2*inter) / (2*inter, dim)
    matmul pair.  bf16 matmul inputs, f32 accumulation and f32 elementwise."""
    z = z_f32.astype(jnp.bfloat16)
    h = jnp.dot(z, w1_ref[cam], preferred_element_type=jnp.float32) + b1_ref[cam]
    h = jnp.maximum(h, 0.0)
    a = jnp.dot(h.astype(jnp.bfloat16), w2_ref[cam],
                preferred_element_type=jnp.float32) + b2_ref[cam]
    return jax.nn.sigmoid(a)


def iaff_kernel(t_ref, w1_ref, b1_ref, w2_ref, b2_ref, o_ref):
    """grid = (batch_blocks,).  t_ref block: (TB, N, dim) -- the whole sequence
    for this batch tile.  The carry x stays in vregs across the (unrolled)
    sequence loop; o_ref is written exactly once at the end."""
    n = t_ref.shape[1]
    x = t_ref[:, 0, :].astype(jnp.float32)
    # N is small and static -> fully unrolled straight-line region for the
    # LLO scheduler (equivalent to lax.fori_loop(..., unroll=True)).
    for i in range(1, n):
        y = t_ref[:, i, :].astype(jnp.float32)
        d = x - y
        w1 = _ms_cam_fused(x + y, 0, w1_ref, b1_ref, w2_ref, b2_ref)
        mid = y + w1 * d                        # == x*w1 + y*(1-w1)
        w2 = _ms_cam_fused(mid, 1, w1_ref, b1_ref, w2_ref, b2_ref)
        x = y + w2 * d                          # == x*w2 + y*(1-w2)
    o_ref[...] = x.astype(o_ref.dtype)


def _pick_batch_block(B, max_tb=256):
    """Largest divisor of B <= max_tb (prefer multiples of 8); for B >= 16 also
    guarantee >= 2 batch blocks so v7x's 2nd TensorCore is used."""
    cap = min(max_tb, B)
    if B >= 16:
        cap = min(cap, B // 2)
    divisors = [d for d in range(1, cap + 1) if B % d == 0]
    mult8 = [d for d in divisors if d % 8 == 0]
    return max(mult8) if mult8 else max(divisors)


def iaff_pallas(t_bnd, packed, *, batch_block=None):
    """t_bnd: (B, N, dim) f32 (PyTorch layout, no wrapper transpose).
    packed = (w1_all, b1_all, w2_all, b2_all) with shapes
      (2, dim, 2*inter) bf16, (2, 1, 2*inter) f32,
      (2, 2*inter, dim) bf16, (2, 1, dim) f32."""
    B, N, dim = t_bnd.shape
    w1_all, b1_all, w2_all, b2_all = packed

    tb = batch_block if batch_block is not None else _pick_batch_block(B)
    assert B % tb == 0, "batch block must divide batch"
    grid = (B // tb,)

    def full_spec(arr):
        nd = arr.ndim
        return pl.BlockSpec(arr.shape, lambda b, _n=nd: (0,) * _n)

    grid_spec = pltpu.PrefetchScalarGridSpec(
        num_scalar_prefetch=0,
        grid=grid,
        in_specs=[
            # whole sequence for one batch tile, straight from the (B, N, dim)
            # layout -- no wrapper transpose / extra HBM pass.
            pl.BlockSpec((tb, N, dim), lambda b: (b, 0, 0)),
            full_spec(w1_all), full_spec(b1_all),
            full_spec(w2_all), full_spec(b2_all),
        ],
        out_specs=pl.BlockSpec((tb, dim), lambda b: (b, 0)),
    )

    return pl.pallas_call(
        iaff_kernel,
        out_shape=jax.ShapeDtypeStruct((B, dim), jnp.float32),
        grid_spec=grid_spec,
        compiler_params=pltpu.CompilerParams(
            dimension_semantics=("parallel",),
        ),
    )(t_bnd, w1_all, b1_all, w2_all, b2_all)


# ----------------------------- parameter setup -------------------------------

def _fold_conv_bn(w, b, gamma, beta, mean, var, eps=1e-5):
    """Fold Conv1d(k=1) + eval-mode BatchNorm1d into (in, out) matmul weight + bias."""
    s = gamma / jnp.sqrt(var + eps)               # (out,)
    w_eff = w * s[:, None]                        # (out, in)
    b_eff = s * (b - mean) + beta                 # (out,)
    return w_eff.T.astype(jnp.float32), b_eff.reshape(1, -1).astype(jnp.float32)


def _init_branch(key, dim, inter):
    """One MS_CAM branch: conv(dim->inter)+BN, relu, conv(inter->dim)+BN."""
    ks = jax.random.split(key, 10)
    w1 = 0.05 * jax.random.normal(ks[0], (inter, dim), jnp.float32)
    b1 = 0.05 * jax.random.normal(ks[1], (inter,), jnp.float32)
    g1 = 1.0 + 0.1 * jax.random.normal(ks[2], (inter,), jnp.float32)
    be1 = 0.1 * jax.random.normal(ks[3], (inter,), jnp.float32)
    m1 = 0.1 * jax.random.normal(ks[4], (inter,), jnp.float32)
    v1 = 1.0 + 0.1 * jnp.abs(jax.random.normal(ks[5], (inter,), jnp.float32))

    w2 = 0.05 * jax.random.normal(ks[6], (dim, inter), jnp.float32)
    b2 = 0.05 * jax.random.normal(ks[7], (dim,), jnp.float32)
    g2 = 1.0 + 0.1 * jax.random.normal(ks[8], (dim,), jnp.float32)
    be2 = 0.1 * jax.random.normal(ks[9], (dim,), jnp.float32)
    m2 = jnp.zeros((dim,), jnp.float32)
    v2 = jnp.ones((dim,), jnp.float32)

    raw = (w1, b1, g1, be1, m1, v1, w2, b2, g2, be2, m2, v2)
    W1, B1 = _fold_conv_bn(w1, b1, g1, be1, m1, v1)   # (dim, inter), (1, inter)
    W2, B2 = _fold_conv_bn(w2, b2, g2, be2, m2, v2)   # (inter, dim), (1, dim)
    return (W1, B1, W2, B2), raw


def _fuse_branches(local, glob):
    """Fuse one CAM's local+global branches into a single matmul pair.
    Exact only because spatial length W == 1 -> AdaptiveAvgPool1d(1) is identity."""
    W1l, b1l, W2l, b2l = local
    W1g, b1g, W2g, b2g = glob
    W1 = jnp.concatenate([W1l, W1g], axis=1)          # (dim, 2*inter)
    b1 = jnp.concatenate([b1l, b1g], axis=1)          # (1, 2*inter)
    W2 = jnp.concatenate([W2l, W2g], axis=0)          # (2*inter, dim)
    b2 = b2l + b2g                                    # (1, dim)
    return W1, b1, W2, b2


def init_iaff_params(key, dim, r):
    """Returns (packed, raw).  packed = 4 stacked arrays covering both CAMs."""
    inter = dim // r
    keys = jax.random.split(key, 4)   # cam1.local, cam1.global, cam2.local, cam2.global
    folded, raw = [], []
    for k in keys:
        f, rw = _init_branch(k, dim, inter)
        folded.append(f)
        raw.append(rw)
    cam1 = _fuse_branches(folded[0], folded[1])
    cam2 = _fuse_branches(folded[2], folded[3])
    w1_all = jnp.stack([cam1[0], cam2[0]]).astype(jnp.bfloat16)   # (2, dim, 2*inter)
    b1_all = jnp.stack([cam1[1], cam2[1]]).astype(jnp.float32)    # (2, 1, 2*inter)
    w2_all = jnp.stack([cam1[2], cam2[2]]).astype(jnp.bfloat16)   # (2, 2*inter, dim)
    b2_all = jnp.stack([cam1[3], cam2[3]]).astype(jnp.float32)    # (2, 1, dim)
    packed = (w1_all, b1_all, w2_all, b2_all)
    return packed, raw


# ----------------------------- pure-JAX references ---------------------------

def _branch_ref(z, raw):
    (w1, b1, g1, be1, m1, v1, w2, b2, g2, be2, m2, v2) = raw
    eps = 1e-5
    h = z @ w1.T + b1
    h = (h - m1) / jnp.sqrt(v1 + eps) * g1 + be1
    h = jnp.maximum(h, 0.0)
    o = h @ w2.T + b2
    o = (o - m2) / jnp.sqrt(v2 + eps) * g2 + be2
    return o


def _ms_cam_ref(z, raw_local, raw_global):
    return jax.nn.sigmoid(_branch_ref(z, raw_local) + _branch_ref(z, raw_global))


def iaff_ref(t_bnd, raw):
    """Full-f32, un-folded reference matching the PyTorch module semantics."""
    cam1_l, cam1_g, cam2_l, cam2_g = raw
    x = t_bnd[:, 0, :]
    for i in range(1, t_bnd.shape[1]):
        y = t_bnd[:, i, :]
        w1 = _ms_cam_ref(x + y, cam1_l, cam1_g)
        mid = x * w1 + y * (1.0 - w1)
        w2 = _ms_cam_ref(mid, cam2_l, cam2_g)
        x = x * w2 + y * (1.0 - w2)
    return x


def iaff_packed_ref(t_bnd, packed):
    """Reference using exactly the packed bf16 weights the kernel consumes."""
    w1_all, b1_all, w2_all, b2_all = packed

    def cam(z, c):
        zb = z.astype(jnp.bfloat16)
        h = jnp.maximum(
            jnp.dot(zb, w1_all[c], preferred_element_type=jnp.float32) + b1_all[c], 0.0)
        a = jnp.dot(h.astype(jnp.bfloat16), w2_all[c],
                    preferred_element_type=jnp.float32) + b2_all[c]
        return jax.nn.sigmoid(a)

    x = t_bnd[:, 0, :]
    for i in range(1, t_bnd.shape[1]):
        y = t_bnd[:, i, :]
        d = x - y
        mid = y + cam(x + y, 0) * d
        x = y + cam(mid, 1) * d
    return x


# ----------------------------------- main ------------------------------------

if __name__ == "__main__":
    B, N, DIM, R = 8, 4, 256, 4          # 2*inter = 128 -> lane-dense hidden dim

    key = jax.random.PRNGKey(0)
    k_t, k_p = jax.random.split(key)
    t = jax.random.normal(k_t, (B, N, DIM), jnp.float32)   # PyTorch-style (B, N, dim)

    packed, raw_params = init_iaff_params(k_p, DIM, R)

    out = jax.block_until_ready(iaff_pallas(t, packed))

    # Tight check vs. a reference using the very same fused bf16 weights.
    expected_packed = iaff_packed_ref(t, packed)
    np.testing.assert_allclose(np.asarray(out), np.asarray(expected_packed),
                               rtol=1e-2, atol=1e-2)

    # Loose check vs. the full-f32 un-folded PyTorch-semantics reference
    # (difference is only bf16 weight/activation quantization).
    expected_raw = iaff_ref(t, raw_params)
    np.testing.assert_allclose(np.asarray(out), np.asarray(expected_raw),
                               rtol=1e-1, atol=1e-1)

    print("KERNEL_OK")
</pallas_src>

<mosaic_0001>
module attributes {stable_mosaic.version = 11 : i64} {
  func.func @iaff_kernel(%arg0: i32, %arg1: memref<8x4x256xf32, #tpu.memory_space<vmem>>, %arg2: memref<2x256x128xbf16, #tpu.memory_space<vmem>>, %arg3: memref<2x1x128xf32, #tpu.memory_space<vmem>>, %arg4: memref<2x128x256xbf16, #tpu.memory_space<vmem>>, %arg5: memref<2x1x256xf32, #tpu.memory_space<vmem>>, %arg6: memref<8x256xf32, #tpu.memory_space<vmem>>) attributes {dimension_semantics = [#tpu.dimension_semantics<parallel>], iteration_bounds = array<i64: 1>, scalar_prefetch = 0 : i64, scratch_operands = 0 : i64, tpu.core_type = #tpu.core_type<tc>, window_params = [{transform_indices = @transform_0, window_bounds = array<i64: 8, 4, 256>}, {pipeline_mode = #tpu.pipeline_mode<synchronous>, transform_indices = @transform_1, window_bounds = array<i64: 2, 256, 128>}, {pipeline_mode = #tpu.pipeline_mode<synchronous>, transform_indices = @transform_2, window_bounds = array<i64: 2, 1, 128>}, {pipeline_mode = #tpu.pipeline_mode<synchronous>, transform_indices = @transform_3, window_bounds = array<i64: 2, 128, 256>}, {pipeline_mode = #tpu.pipeline_mode<synchronous>, transform_indices = @transform_4, window_bounds = array<i64: 2, 1, 256>}, {transform_indices = @transform_5, window_bounds = array<i64: 8, 256>}]} {
    %c0 = arith.constant 0 : index
    %c0_0 = arith.constant 0 : index
    %c0_1 = arith.constant 0 : index
    %0 = vector.load %arg1[%c0, %c0_0, %c0_1] : memref<8x4x256xf32, #tpu.memory_space<vmem>>, vector<8x1x256xf32>
    %1 = vector.shape_cast %0 : vector<8x1x256xf32> to vector<8x256xf32>
    %c0_2 = arith.constant 0 : index
    %c1 = arith.constant 1 : index
    %c0_3 = arith.constant 0 : index
    %2 = vector.load %arg1[%c0_2, %c1, %c0_3] : memref<8x4x256xf32, #tpu.memory_space<vmem>>, vector<8x1x256xf32>
    %3 = vector.shape_cast %2 : vector<8x1x256xf32> to vector<8x256xf32>
    %4 = arith.subf %1, %3 : vector<8x256xf32>
    %5 = arith.addf %1, %3 : vector<8x256xf32>
    %6 = arith.truncf %5 : vector<8x256xf32> to vector<8x256xbf16>
    %c0_4 = arith.constant 0 : index
    %c0_5 = arith.constant 0 : index
    %c0_6 = arith.constant 0 : index
    %7 = vector.load %arg2[%c0_4, %c0_5, %c0_6] : memref<2x256x128xbf16, #tpu.memory_space<vmem>>, vector<1x256x128xbf16>
    %8 = vector.shape_cast %7 : vector<1x256x128xbf16> to vector<256x128xbf16>
    %cst = arith.constant dense<0.000000e+00> : vector<8x128xf32>
    %9 = tpu.matmul %6, %8, %cst {dimension_numbers = #tpu.dot_dimension_numbers<[1], [0], [0], [1], [0, 0, 1, 1], [], []>} : vector<8x256xbf16>, vector<256x128xbf16>, vector<8x128xf32> -> vector<8x128xf32>
    %c0_7 = arith.constant 0 : index
    %c0_8 = arith.constant 0 : index
    %c0_9 = arith.constant 0 : index
    %10 = vector.load %arg3[%c0_7, %c0_8, %c0_9] : memref<2x1x128xf32, #tpu.memory_space<vmem>>, vector<1x1x128xf32>
    %11 = vector.shape_cast %10 : vector<1x1x128xf32> to vector<1x128xf32>
    %12 = vector.broadcast %11 : vector<1x128xf32> to vector<8x128xf32>
    %13 = arith.addf %9, %12 : vector<8x128xf32>
    %cst_10 = arith.constant 0.000000e+00 : f32
    %14 = vector.broadcast %cst_10 : f32 to vector<8x128xf32>
    %15 = arith.maximumf %13, %14 : vector<8x128xf32>
    %16 = arith.truncf %15 : vector<8x128xf32> to vector<8x128xbf16>
    %c0_11 = arith.constant 0 : index
    %c0_12 = arith.constant 0 : index
    %c0_13 = arith.constant 0 : index
    %17 = vector.load %arg4[%c0_11, %c0_12, %c0_13] : memref<2x128x256xbf16, #tpu.memory_space<vmem>>, vector<1x128x256xbf16>
    %18 = vector.shape_cast %17 : vector<1x128x256xbf16> to vector<128x256xbf16>
    %cst_14 = arith.constant dense<0.000000e+00> : vector<8x256xf32>
    %19 = tpu.matmul %16, %18, %cst_14 {dimension_numbers = #tpu.dot_dimension_numbers<[1], [0], [0], [1], [0, 0, 1, 1], [], []>} : vector<8x128xbf16>, vector<128x256xbf16>, vector<8x256xf32> -> vector<8x256xf32>
    %c0_15 = arith.constant 0 : index
    %c0_16 = arith.constant 0 : index
    %c0_17 = arith.constant 0 : index
    %20 = vector.load %arg5[%c0_15, %c0_16, %c0_17] : memref<2x1x256xf32, #tpu.memory_space<vmem>>, vector<1x1x256xf32>
    %21 = vector.shape_cast %20 : vector<1x1x256xf32> to vector<1x256xf32>
    %22 = vector.broadcast %21 : vector<1x256xf32> to vector<8x256xf32>
    %23 = arith.addf %19, %22 : vector<8x256xf32>
    %24 = arith.negf %23 : vector<8x256xf32>
    %25 = math.exp %24 : vector<8x256xf32>
    %cst_18 = arith.constant 1.000000e+00 : f32
    %26 = vector.broadcast %cst_18 : f32 to vector<8x256xf32>
    %27 = arith.addf %26, %25 : vector<8x256xf32>
    %28 = arith.divf %26, %27 : vector<8x256xf32>
    %29 = arith.mulf %28, %4 : vector<8x256xf32>
    %30 = arith.addf %3, %29 : vector<8x256xf32>
    %31 = arith.truncf %30 : vector<8x256xf32> to vector<8x256xbf16>
    %c1_19 = arith.constant 1 : index
    %c0_20 = arith.constant 0 : index
    %c0_21 = arith.constant 0 : index
    %32 = vector.load %arg2[%c1_19, %c0_20, %c0_21] : memref<2x256x128xbf16, #tpu.memory_space<vmem>>, vector<1x256x128xbf16>
    %33 = vector.shape_cast %32 : vector<1x256x128xbf16> to vector<256x128xbf16>
    %cst_22 = arith.constant dense<0.000000e+00> : vector<8x128xf32>
    %34 = tpu.matmul %31, %33, %cst_22 {dimension_numbers = #tpu.dot_dimension_numbers<[1], [0], [0], [1], [0, 0, 1, 1], [], []>} : vector<8x256xbf16>, vector<256x128xbf16>, vector<8x128xf32> -> vector<8x128xf32>
    %c1_23 = arith.constant 1 : index
    %c0_24 = arith.constant 0 : index
    %c0_25 = arith.constant 0 : index
    %35 = vector.load %arg3[%c1_23, %c0_24, %c0_25] : memref<2x1x128xf32, #tpu.memory_space<vmem>>, vector<1x1x128xf32>
    %36 = vector.shape_cast %35 : vector<1x1x128xf32> to vector<1x128xf32>
    %37 = vector.broadcast %36 : vector<1x128xf32> to vector<8x128xf32>
    %38 = arith.addf %34, %37 : vector<8x128xf32>
    %cst_26 = arith.constant 0.000000e+00 : f32
    %39 = vector.broadcast %cst_26 : f32 to vector<8x128xf32>
    %40 = arith.maximumf %38, %39 : vector<8x128xf32>
    %41 = arith.truncf %40 : vector<8x128xf32> to vector<8x128xbf16>
    %c1_27 = arith.constant 1 : index
    %c0_28 = arith.constant 0 : index
    %c0_29 = arith.constant 0 : index
    %42 = vector.load %arg4[%c1_27, %c0_28, %c0_29] : memref<2x128x256xbf16, #tpu.memory_space<vmem>>, vector<1x128x256xbf16>
    %43 = vector.shape_cast %42 : vector<1x128x256xbf16> to vector<128x256xbf16>
    %cst_30 = arith.constant dense<0.000000e+00> : vector<8x256xf32>
    %44 = tpu.matmul %41, %43, %cst_30 {dimension_numbers = #tpu.dot_dimension_numbers<[1], [0], [0], [1], [0, 0, 1, 1], [], []>} : vector<8x128xbf16>, vector<128x256xbf16>, vector<8x256xf32> -> vector<8x256xf32>
    %c1_31 = arith.constant 1 : index
    %c0_32 = arith.constant 0 : index
    %c0_33 = arith.constant 0 : index
    %45 = vector.load %arg5[%c1_31, %c0_32, %c0_33] : memref<2x1x256xf32, #tpu.memory_space<vmem>>, vector<1x1x256xf32>
    %46 = vector.shape_cast %45 : vector<1x1x256xf32> to vector<1x256xf32>
    %47 = vector.broadcast %46 : vector<1x256xf32> to vector<8x256xf32>
    %48 = arith.addf %44, %47 : vector<8x256xf32>
    %49 = arith.negf %48 : vector<8x256xf32>
    %50 = math.exp %49 : vector<8x256xf32>
    %cst_34 = arith.constant 1.000000e+00 : f32
    %51 = vector.broadcast %cst_34 : f32 to vector<8x256xf32>
    %52 = arith.addf %51, %50 : vector<8x256xf32>
    %53 = arith.divf %51, %52 : vector<8x256xf32>
    %54 = arith.mulf %53, %4 : vector<8x256xf32>
    %55 = arith.addf %3, %54 : vector<8x256xf32>
    %c0_35 = arith.constant 0 : index
    %c2 = arith.constant 2 : index
    %c0_36 = arith.constant 0 : index
    %56 = vector.load %arg1[%c0_35, %c2, %c0_36] : memref<8x4x256xf32, #tpu.memory_space<vmem>>, vector<8x1x256xf32>
    %57 = vector.shape_cast %56 : vector<8x1x256xf32> to vector<8x256xf32>
    %58 = arith.subf %55, %57 : vector<8x256xf32>
    %59 = arith.addf %55, %57 : vector<8x256xf32>
    %60 = arith.truncf %59 : vector<8x256xf32> to vector<8x256xbf16>
    %c0_37 = arith.constant 0 : index
    %c0_38 = arith.constant 0 : index
    %c0_39 = arith.constant 0 : index
    %61 = vector.load %arg2[%c0_37, %c0_38, %c0_39] : memref<2x256x128xbf16, #tpu.memory_space<vmem>>, vector<1x256x128xbf16>
    %62 = vector.shape_cast %61 : vector<1x256x128xbf16> to vector<256x128xbf16>
    %cst_40 = arith.constant dense<0.000000e+00> : vector<8x128xf32>
    %63 = tpu.matmul %60, %62, %cst_40 {dimension_numbers = #tpu.dot_dimension_numbers<[1], [0], [0], [1], [0, 0, 1, 1], [], []>} : vector<8x256xbf16>, vector<256x128xbf16>, vector<8x128xf32> -> vector<8x128xf32>
    %c0_41 = arith.constant 0 : index
    %c0_42 = arith.constant 0 : index
    %c0_43 = arith.constant 0 : index
    %64 = vector.load %arg3[%c0_41, %c0_42, %c0_43] : memref<2x1x128xf32, #tpu.memory_space<vmem>>, vector<1x1x128xf32>
    %65 = vector.shape_cast %64 : vector<1x1x128xf32> to vector<1x128xf32>
    %66 = vector.broadcast %65 : vector<1x128xf32> to vector<8x128xf32>
    %67 = arith.addf %63, %66 : vector<8x128xf32>
    %cst_44 = arith.constant 0.000000e+00 : f32
    %68 = vector.broadcast %cst_44 : f32 to vector<8x128xf32>
    %69 = arith.maximumf %67, %68 : vector<8x128xf32>
    %70 = arith.truncf %69 : vector<8x128xf32> to vector<8x128xbf16>
    %c0_45 = arith.constant 0 : index
    %c0_46 = arith.constant 0 : index
    %c0_47 = arith.constant 0 : index
    %71 = vector.load %arg4[%c0_45, %c0_46, %c0_47] : memref<2x128x256xbf16, #tpu.memory_space<vmem>>, vector<1x128x256xbf16>
    %72 = vector.shape_cast %71 : vector<1x128x256xbf16> to vector<128x256xbf16>
    %cst_48 = arith.constant dense<0.000000e+00> : vector<8x256xf32>
    %73 = tpu.matmul %70, %72, %cst_48 {dimension_numbers = #tpu.dot_dimension_numbers<[1], [0], [0], [1], [0, 0, 1, 1], [], []>} : vector<8x128xbf16>, vector<128x256xbf16>, vector<8x256xf32> -> vector<8x256xf32>
    %c0_49 = arith.constant 0 : index
    %c0_50 = arith.constant 0 : index
    %c0_51 = arith.constant 0 : index
    %74 = vector.load %arg5[%c0_49, %c0_50, %c0_51] : memref<2x1x256xf32, #tpu.memory_space<vmem>>, vector<1x1x256xf32>
    %75 = vector.shape_cast %74 : vector<1x1x256xf32> to vector<1x256xf32>
    %76 = vector.broadcast %75 : vector<1x256xf32> to vector<8x256xf32>
    %77 = arith.addf %73, %76 : vector<8x256xf32>
    %78 = arith.negf %77 : vector<8x256xf32>
    %79 = math.exp %78 : vector<8x256xf32>
    %cst_52 = arith.constant 1.000000e+00 : f32
    %80 = vector.broadcast %cst_52 : f32 to vector<8x256xf32>
    %81 = arith.addf %80, %79 : vector<8x256xf32>
    %82 = arith.divf %80, %81 : vector<8x256xf32>
    %83 = arith.mulf %82, %58 : vector<8x256xf32>
    %84 = arith.addf %57, %83 : vector<8x256xf32>
    %85 = arith.truncf %84 : vector<8x256xf32> to vector<8x256xbf16>
    %c1_53 = arith.constant 1 : index
    %c0_54 = arith.constant 0 : index
    %c0_55 = arith.constant 0 : index
    %86 = vector.load %arg2[%c1_53, %c0_54, %c0_55] : memref<2x256x128xbf16, #tpu.memory_space<vmem>>, vector<1x256x128xbf16>
    %87 = vector.shape_cast %86 : vector<1x256x128xbf16> to vector<256x128xbf16>
    %cst_56 = arith.constant dense<0.000000e+00> : vector<8x128xf32>
    %88 = tpu.matmul %85, %87, %cst_56 {dimension_numbers = #tpu.dot_dimension_numbers<[1], [0], [0], [1], [0, 0, 1, 1], [], []>} : vector<8x256xbf16>, vector<256x128xbf16>, vector<8x128xf32> -> vector<8x128xf32>
    %c1_57 = arith.constant 1 : index
    %c0_58 = arith.constant 0 : index
    %c0_59 = arith.constant 0 : index
    %89 = vector.load %arg3[%c1_57, %c0_58, %c0_59] : memref<2x1x128xf32, #tpu.memory_space<vmem>>, vector<1x1x128xf32>
    %90 = vector.shape_cast %89 : vector<1x1x128xf32> to vector<1x128xf32>
    %91 = vector.broadcast %90 : vector<1x128xf32> to vector<8x128xf32>
    %92 = arith.addf %88, %91 : vector<8x128xf32>
    %cst_60 = arith.constant 0.000000e+00 : f32
    %93 = vector.broadcast %cst_60 : f32 to vector<8x128xf32>
    %94 = arith.maximumf %92, %93 : vector<8x128xf32>
    %95 = arith.truncf %94 : vector<8x128xf32> to vector<8x128xbf16>
    %c1_61 = arith.constant 1 : index
    %c0_62 = arith.constant 0 : index
    %c0_63 = arith.constant 0 : index
    %96 = vector.load %arg4[%c1_61, %c0_62, %c0_63] : memref<2x128x256xbf16, #tpu.memory_space<vmem>>, vector<1x128x256xbf16>
    %97 = vector.shape_cast %96 : vector<1x128x256xbf16> to vector<128x256xbf16>
    %cst_64 = arith.constant dense<0.000000e+00> : vector<8x256xf32>
    %98 = tpu.matmul %95, %97, %cst_64 {dimension_numbers = #tpu.dot_dimension_numbers<[1], [0], [0], [1], [0, 0, 1, 1], [], []>} : vector<8x128xbf16>, vector<128x256xbf16>, vector<8x256xf32> -> vector<8x256xf32>
    %c1_65 = arith.constant 1 : index
    %c0_66 = arith.constant 0 : index
    %c0_67 = arith.constant 0 : index
    %99 = vector.load %arg5[%c1_65, %c0_66, %c0_67] : memref<2x1x256xf32, #tpu.memory_space<vmem>>, vector<1x1x256xf32>
    %100 = vector.shape_cast %99 : vector<1x1x256xf32> to vector<1x256xf32>
    %101 = vector.broadcast %100 : vector<1x256xf32> to vector<8x256xf32>
    %102 = arith.addf %98, %101 : vector<8x256xf32>
    %103 = arith.negf %102 : vector<8x256xf32>
    %104 = math.exp %103 : vector<8x256xf32>
    %cst_68 = arith.constant 1.000000e+00 : f32
    %105 = vector.broadcast %cst_68 : f32 to vector<8x256xf32>
    %106 = arith.addf %105, %104 : vector<8x256xf32>
    %107 = arith.divf %105, %106 : vector<8x256xf32>
    %108 = arith.mulf %107, %58 : vector<8x256xf32>
    %109 = arith.addf %57, %108 : vector<8x256xf32>
    %c0_69 = arith.constant 0 : index
    %c3 = arith.constant 3 : index
    %c0_70 = arith.constant 0 : index
    %110 = vector.load %arg1[%c0_69, %c3, %c0_70] : memref<8x4x256xf32, #tpu.memory_space<vmem>>, vector<8x1x256xf32>
    %111 = vector.shape_cast %110 : vector<8x1x256xf32> to vector<8x256xf32>
    %112 = arith.subf %109, %111 : vector<8x256xf32>
    %113 = arith.addf %109, %111 : vector<8x256xf32>
    %114 = arith.truncf %113 : vector<8x256xf32> to vector<8x256xbf16>
    %c0_71 = arith.constant 0 : index
    %c0_72 = arith.constant 0 : index
    %c0_73 = arith.constant 0 : index
    %115 = vector.load %arg2[%c0_71, %c0_72, %c0_73] : memref<2x256x128xbf16, #tpu.memory_space<vmem>>, vector<1x256x128xbf16>
    %116 = vector.shape_cast %115 : vector<1x256x128xbf16> to vector<256x128xbf16>
    %cst_74 = arith.constant dense<0.000000e+00> : vector<8x128xf32>
    %117 = tpu.matmul %114, %116, %cst_74 {dimension_numbers = #tpu.dot_dimension_numbers<[1], [0], [0], [1], [0, 0, 1, 1], [], []>} : vector<8x256xbf16>, vector<256x128xbf16>, vector<8x128xf32> -> vector<8x128xf32>
    %c0_75 = arith.constant 0 : index
    %c0_76 = arith.constant 0 : index
    %c0_77 = arith.constant 0 : index
    %118 = vector.load %arg3[%c0_75, %c0_76, %c0_77] : memref<2x1x128xf32, #tpu.memory_space<vmem>>, vector<1x1x128xf32>
    %119 = vector.shape_cast %118 : vector<1x1x128xf32> to vector<1x128xf32>
    %120 = vector.broadcast %119 : vector<1x128xf32> to vector<8x128xf32>
    %121 = arith.addf %117, %120 : vector<8x128xf32>
    %cst_78 = arith.constant 0.000000e+00 : f32
    %122 = vector.broadcast %cst_78 : f32 to vector<8x128xf32>
    %123 = arith.maximumf %121, %122 : vector<8x128xf32>
    %124 = arith.truncf %123 : vector<8x128xf32> to vector<8x128xbf16>
    %c0_79 = arith.constant 0 : index
    %c0_80 = arith.constant 0 : index
    %c0_81 = arith.constant 0 : index
    %125 = vector.load %arg4[%c0_79, %c0_80, %c0_81] : memref<2x128x256xbf16, #tpu.memory_space<vmem>>, vector<1x128x256xbf16>
    %126 = vector.shape_cast %125 : vector<1x128x256xbf16> to vector<128x256xbf16>
    %cst_82 = arith.constant dense<0.000000e+00> : vector<8x256xf32>
    %127 = tpu.matmul %124, %126, %cst_82 {dimension_numbers = #tpu.dot_dimension_numbers<[1], [0], [0], [1], [0, 0, 1, 1], [], []>} : vector<8x128xbf16>, vector<128x256xbf16>, vector<8x256xf32> -> vector<8x256xf32>
    %c0_83 = arith.constant 0 : index
    %c0_84 = arith.constant 0 : index
    %c0_85 = arith.constant 0 : index
    %128 = vector.load %arg5[%c0_83, %c0_84, %c0_85] : memref<2x1x256xf32, #tpu.memory_space<vmem>>, vector<1x1x256xf32>
    %129 = vector.shape_cast %128 : vector<1x1x256xf32> to vector<1x256xf32>
    %130 = vector.broadcast %129 : vector<1x256xf32> to vector<8x256xf32>
    %131 = arith.addf %127, %130 : vector<8x256xf32>
    %132 = arith.negf %131 : vector<8x256xf32>
    %133 = math.exp %132 : vector<8x256xf32>
    %cst_86 = arith.constant 1.000000e+00 : f32
    %134 = vector.broadcast %cst_86 : f32 to vector<8x256xf32>
    %135 = arith.addf %134, %133 : vector<8x256xf32>
    %136 = arith.divf %134, %135 : vector<8x256xf32>
    %137 = arith.mulf %136, %112 : vector<8x256xf32>
    %138 = arith.addf %111, %137 : vector<8x256xf32>
    %139 = arith.truncf %138 : vector<8x256xf32> to vector<8x256xbf16>
    %c1_87 = arith.constant 1 : index
    %c0_88 = arith.constant 0 : index
    %c0_89 = arith.constant 0 : index
    %140 = vector.load %arg2[%c1_87, %c0_88, %c0_89] : memref<2x256x128xbf16, #tpu.memory_space<vmem>>, vector<1x256x128xbf16>
    %141 = vector.shape_cast %140 : vector<1x256x128xbf16> to vector<256x128xbf16>
    %cst_90 = arith.constant dense<0.000000e+00> : vector<8x128xf32>
    %142 = tpu.matmul %139, %141, %cst_90 {dimension_numbers = #tpu.dot_dimension_numbers<[1], [0], [0], [1], [0, 0, 1, 1], [], []>} : vector<8x256xbf16>, vector<256x128xbf16>, vector<8x128xf32> -> vector<8x128xf32>
    %c1_91 = arith.constant 1 : index
    %c0_92 = arith.constant 0 : index
    %c0_93 = arith.constant 0 : index
    %143 = vector.load %arg3[%c1_91, %c0_92, %c0_93] : memref<2x1x128xf32, #tpu.memory_space<vmem>>, vector<1x1x128xf32>
    %144 = vector.shape_cast %143 : vector<1x1x128xf32> to vector<1x128xf32>
    %145 = vector.broadcast %144 : vector<1x128xf32> to vector<8x128xf32>
    %146 = arith.addf %142, %145 : vector<8x128xf32>
    %cst_94 = arith.constant 0.000000e+00 : f32
    %147 = vector.broadcast %cst_94 : f32 to vector<8x128xf32>
    %148 = arith.maximumf %146, %147 : vector<8x128xf32>
    %149 = arith.truncf %148 : vector<8x128xf32> to vector<8x128xbf16>
    %c1_95 = arith.constant 1 : index
    %c0_96 = arith.constant 0 : index
    %c0_97 = arith.constant 0 : index
    %150 = vector.load %arg4[%c1_95, %c0_96, %c0_97] : memref<2x128x256xbf16, #tpu.memory_space<vmem>>, vector<1x128x256xbf16>
    %151 = vector.shape_cast %150 : vector<1x128x256xbf16> to vector<128x256xbf16>
    %cst_98 = arith.constant dense<0.000000e+00> : vector<8x256xf32>
    %152 = tpu.matmul %149, %151, %cst_98 {dimension_numbers = #tpu.dot_dimension_numbers<[1], [0], [0], [1], [0, 0, 1, 1], [], []>} : vector<8x128xbf16>, vector<128x256xbf16>, vector<8x256xf32> -> vector<8x256xf32>
    %c1_99 = arith.constant 1 : index
    %c0_100 = arith.constant 0 : index
    %c0_101 = arith.constant 0 : index
    %153 = vector.load %arg5[%c1_99, %c0_100, %c0_101] : memref<2x1x256xf32, #tpu.memory_space<vmem>>, vector<1x1x256xf32>
    %154 = vector.shape_cast %153 : vector<1x1x256xf32> to vector<1x256xf32>
    %155 = vector.broadcast %154 : vector<1x256xf32> to vector<8x256xf32>
    %156 = arith.addf %152, %155 : vector<8x256xf32>
    %157 = arith.negf %156 : vector<8x256xf32>
    %158 = math.exp %157 : vector<8x256xf32>
    %cst_102 = arith.constant 1.000000e+00 : f32
    %159 = vector.broadcast %cst_102 : f32 to vector<8x256xf32>
    %160 = arith.addf %159, %158 : vector<8x256xf32>
    %161 = arith.divf %159, %160 : vector<8x256xf32>
    %162 = arith.mulf %161, %112 : vector<8x256xf32>
    %163 = arith.addf %111, %162 : vector<8x256xf32>
    %c0_103 = arith.constant 0 : index
    %c0_104 = arith.constant 0 : index
    %164 = vector.load %arg6[%c0_103, %c0_104] : memref<8x256xf32, #tpu.memory_space<vmem>>, vector<8x256xf32>
    tpu.vector_store %arg6[%c0_103, %c0_104], %163 {strides = array<i32>} : memref<8x256xf32, #tpu.memory_space<vmem>>, vector<8x256xf32>,
    return
  }
  func.func @transform_0(%arg0: i32) -> (i32, i32, i32) {
    %c0_i32 = arith.constant 0 : i32
    %c0_i32_0 = arith.constant 0 : i32
    %c0_i32_1 = arith.constant 0 : i32
    return %arg0, %c0_i32, %c0_i32_0 : i32, i32, i32
  }
  func.func @transform_1(%arg0: i32) -> (i32, i32, i32) {
    %c0_i32 = arith.constant 0 : i32
    %c0_i32_0 = arith.constant 0 : i32
    %c0_i32_1 = arith.constant 0 : i32
    %c0_i32_2 = arith.constant 0 : i32
    return %c0_i32, %c0_i32_0, %c0_i32_1 : i32, i32, i32
  }
  func.func @transform_2(%arg0: i32) -> (i32, i32, i32) {
    %c0_i32 = arith.constant 0 : i32
    %c0_i32_0 = arith.constant 0 : i32
    %c0_i32_1 = arith.constant 0 : i32
    %c0_i32_2 = arith.constant 0 : i32
    return %c0_i32, %c0_i32_0, %c0_i32_1 : i32, i32, i32
  }
  func.func @transform_3(%arg0: i32) -> (i32, i32, i32) {
    %c0_i32 = arith.constant 0 : i32
    %c0_i32_0 = arith.constant 0 : i32
    %c0_i32_1 = arith.constant 0 : i32
    %c0_i32_2 = arith.constant 0 : i32
    return %c0_i32, %c0_i32_0, %c0_i32_1 : i32, i32, i32
  }
  func.func @transform_4(%arg0: i32) -> (i32, i32, i32) {
    %c0_i32 = arith.constant 0 : i32
    %c0_i32_0 = arith.constant 0 : i32
    %c0_i32_1 = arith.constant 0 : i32
    %c0_i32_2 = arith.constant 0 : i32
    return %c0_i32, %c0_i32_0, %c0_i32_1 : i32, i32, i32
  }
  func.func @transform_5(%arg0: i32) -> (i32, i32) {
    %c0_i32 = arith.constant 0 : i32
    %c0_i32_0 = arith.constant 0 : i32
    return %arg0, %c0_i32 : i32, i32
  }
}

</mosaic_0001>

<llo_original>
// kernel: tpu_custom_call.1
$region0: #{tpu_custom_call.1}
  #allocation0 [shape = 'u32[]', space=smem, size = 0x4, offset = 0x4, fixed_abs, tag = 'smem constant byte address 0x4 - core index']
  #allocation1 [shape = 'u32[72,128]{1,0:T(1,128)}', space=vmem, size = 0x9000, scoped, tag = 'internal scratch']
  %s0 = inlined_call_operand.hbm [shape: f32[8,4,256], index: 0, kind: input, shape index: {}]
  %s1 = inlined_call_operand.hbm [shape: bf16[2,256,128], index: 1, kind: input, shape index: {}]
  %s2 = inlined_call_operand.hbm [shape: f32[2,1,128], index: 2, kind: input, shape index: {}]
  %s3 = inlined_call_operand.hbm [shape: bf16[2,128,256], index: 3, kind: input, shape index: {}]
  %s4 = inlined_call_operand.hbm [shape: f32[2,1,256], index: 4, kind: input, shape index: {}]
  %s5 = inlined_call_operand.hbm [shape: f32[8,256], index: 5, kind: output, shape index: {}]
  %s6 = sld [smem:[#allocation0]]
  $region50: #{tpu_custom_call.1} parent=0
    _
  %s8 = ssub.s32 1, %s6
  %s9 = scalar_select 0, %s8, %s6
  $region1: #{tpu_custom_call.1} parent=0
    #allocation2 [shape = 'u8[32768]{0}', space=vmem, size = 0x8000, scoped, tag = 'input window, operand 0, single buffered']
    #allocation3 [shape = 's32[1]{0}', space=sflag, size = 0x4, scoped, tag = 'scoped memory for tpu_custom_call.1']
    #allocation4 [shape = 's32[1]{0}', space=sflag, size = 0x4, scoped, tag = 'scoped memory for tpu_custom_call.1']
    #allocation5 [shape = 'u8[131072]{0}', space=vmem, size = 0x20000, scoped, tag = 'input window, operand 1, single buffered']
    #allocation6 [shape = 's32[1]{0}', space=sflag, size = 0x4, scoped, tag = 'scoped memory for tpu_custom_call.1']
    #allocation7 [shape = 'u8[1024]{0}', space=vmem, size = 0x400, scoped, tag = 'input window, operand 2, single buffered']
    #allocation8 [shape = 'u8[131072]{0}', space=vmem, size = 0x20000, scoped, tag = 'input window, operand 3, single buffered']
    #allocation9 [shape = 's32[1]{0}', space=sflag, size = 0x4, scoped, tag = 'scoped memory for tpu_custom_call.1']
    #allocation10 [shape = 'u8[2048]{0}', space=vmem, size = 0x800, scoped, tag = 'input window, operand 4, single buffered']
    #allocation11 [shape = 'u8[8192]{0}', space=vmem, size = 0x2000, scoped, tag = 'output window, operand 0, single buffered']
    %10 = vsyncpa [#allocation3], 0
    %11 = vsyncpa [#allocation6], 0
    %12 = vsyncpa [#allocation9], 0
    %13 = vsyncpa [#allocation4], 0
    // Predicated region
    $region2: #{tpu_custom_call.1} parent=1 // pred_check
      _
    $region3: #{tpu_custom_call.1} parent=1 // pred_check_branch
      %15 = sbr.rel (0) target = $region5
    $region4: #{tpu_custom_call.1} parent=1 // pred_region
      %17 = vsyncadd [#allocation3], 0
      %s18 = sshll.u32 %s0, 4
      %s19 = int_to_ptr.hbm [resolvable:$true] %s18
      %s20 = sshll.u32 [#allocation2], 4
      %s21 = int_to_ptr.vmem [resolvable:$true] %s20
      %26 = dma.hbm_to_vmem [thread:$0]  %s19, 1024, %s21, [#allocation3], 128, 128, 8
    $region5: #{tpu_custom_call.1} parent=1 // pred_fallthru
      _
    // Predicated region
    $region6: #{tpu_custom_call.1} parent=1 // pred_check
      _
    $region7: #{tpu_custom_call.1} parent=1 // pred_check_branch
      %28 = sbr.rel (0) target = $region9
    $region8: #{tpu_custom_call.1} parent=1 // pred_region
      %30 = vsyncadd [#allocation6], 0
      %s31 = sshll.u32 %s1, 4
      %s32 = int_to_ptr.hbm [resolvable:$true] %s31
      %s33 = sshll.u32 [#allocation5], 4
      %s34 = int_to_ptr.vmem [resolvable:$true] %s33
      %39 = dma.hbm_to_vmem [thread:$0]  %s32, 4096, %s34, [#allocation6], 64, 64, 4
    $region9: #{tpu_custom_call.1} parent=1 // pred_fallthru
      _
    // Predicated region
    $region10: #{tpu_custom_call.1} parent=1 // pred_check
      _
    $region11: #{tpu_custom_call.1} parent=1 // pred_check_branch
      %41 = sbr.rel (0) target = $region13
    $region12: #{tpu_custom_call.1} parent=1 // pred_region
      %43 = vsyncadd [#allocation6], 0
      %s44 = sshll.u32 %s2, 4
      %s45 = int_to_ptr.hbm [resolvable:$true] %s44
      %s46 = sshll.u32 [#allocation7], 4
      %s47 = int_to_ptr.vmem [resolvable:$true] %s46
      %52 = dma.hbm_to_vmem [thread:$0]  %s45, 32, %s47, [#allocation6], 16, 16, 1
    $region13: #{tpu_custom_call.1} parent=1 // pred_fallthru
      _
    // Predicated region
    $region14: #{tpu_custom_call.1} parent=1 // pred_check
      _
    $region15: #{tpu_custom_call.1} parent=1 // pred_check_branch
      %54 = sbr.rel (0) target = $region17
    $region16: #{tpu_custom_call.1} parent=1 // pred_region
      %56 = vsyncadd [#allocation9], 0
      %s57 = sshll.u32 %s3, 4
      %s58 = int_to_ptr.hbm [resolvable:$true] %s57
      %s59 = sshll.u32 [#allocation8], 4
      %s60 = int_to_ptr.vmem [resolvable:$true] %s59
      %65 = dma.hbm_to_vmem [thread:$0]  %s58, 4096, %s60, [#allocation9], 128, 128, 8
    $region17: #{tpu_custom_call.1} parent=1 // pred_fallthru
      _
    // Predicated region
    $region18: #{tpu_custom_call.1} parent=1 // pred_check
      _
    $region19: #{tpu_custom_call.1} parent=1 // pred_check_branch
      %67 = sbr.rel (0) target = $region21
    $region20: #{tpu_custom_call.1} parent=1 // pred_region
      %69 = vsyncadd [#allocation9], 0
      %s70 = sshll.u32 %s4, 4
      %s71 = int_to_ptr.hbm [resolvable:$true] %s70
      %s72 = sshll.u32 [#allocation10], 4
      %s73 = int_to_ptr.vmem [resolvable:$true] %s72
      %78 = dma.hbm_to_vmem [thread:$0]  %s71, 64, %s73, [#allocation9], 32, 32, 2
    $region21: #{tpu_custom_call.1} parent=1 // pred_fallthru
      _
    // Predicated region
    $region22: #{tpu_custom_call.1} parent=1 // pred_check
      _
    $region23: #{tpu_custom_call.1} parent=1 // pred_check_branch
      %80 = sbr.rel (0) target = $region25
    $region24: #{tpu_custom_call.1} parent=1 // pred_region
      %82 = dma.done [#allocation3], 1024
    $region25: #{tpu_custom_call.1} parent=1 // pred_fallthru
      _
    // Predicated region
    $region26: #{tpu_custom_call.1} parent=1 // pred_check
      _
    $region27: #{tpu_custom_call.1} parent=1 // pred_check_branch
      %84 = sbr.rel (0) target = $region29
    $region28: #{tpu_custom_call.1} parent=1 // pred_region
      %86 = dma.done [#allocation6], 4096
    $region29: #{tpu_custom_call.1} parent=1 // pred_fallthru
      _
    // Predicated region
    $region30: #{tpu_custom_call.1} parent=1 // pred_check
      _
    $region31: #{tpu_custom_call.1} parent=1 // pred_check_branch
      %88 = sbr.rel (0) target = $region33
    $region32: #{tpu_custom_call.1} parent=1 // pred_region
      %90 = dma.done [#allocation6], 32
    $region33: #{tpu_custom_call.1} parent=1 // pred_fallthru
      _
    // Predicated region
    $region34: #{tpu_custom_call.1} parent=1 // pred_check
      _
    $region35: #{tpu_custom_call.1} parent=1 // pred_check_branch
      %92 = sbr.rel (0) target = $region37
    $region36: #{tpu_custom_call.1} parent=1 // pred_region
      %94 = dma.done [#allocation9], 4096
    $region37: #{tpu_custom_call.1} parent=1 // pred_fallthru
      _
    // Predicated region
    $region38: #{tpu_custom_call.1} parent=1 // pred_check
      _
    $region39: #{tpu_custom_call.1} parent=1 // pred_check_branch
      %96 = sbr.rel (0) target = $region41
    $region40: #{tpu_custom_call.1} parent=1 // pred_region
      %98 = dma.done [#allocation9], 64
    $region41: #{tpu_custom_call.1} parent=1 // pred_fallthru
      _
    %v99 = vld [vmem:[#allocation2] ss:$4 sm:$0x3]
    %s100 = scalar_lea.vmem [#allocation2], 8
    %v101 = vld [vmem:[%s100] ss:$4 sm:$0x3]
    %s102 = scalar_lea.vmem [#allocation2], 16
    %v103 = vld [vmem:[%s102] ss:$4 sm:$0x3]
    %s104 = scalar_lea.vmem [#allocation2], 24
    %v105 = vld [vmem:[%s104] ss:$4 sm:$0x3]
    %s106 = scalar_lea.vmem [#allocation2], 32
    %v107 = vld [vmem:[%s106] ss:$4 sm:$0x3]
    %s108 = scalar_lea.vmem [#allocation2], 40
    %v109 = vld [vmem:[%s108] ss:$4 sm:$0x3]
    %s110 = scalar_lea.vmem [#allocation2], 48
    %v111 = vld [vmem:[%s110] ss:$4 sm:$0x3]
    %s112 = scalar_lea.vmem [#allocation2], 56
    %v113 = vld [vmem:[%s112] ss:$4 sm:$0x3]
    %s114 = scalar_lea.vmem [#allocation2], 1
    %v115 = vld [vmem:[%s114] ss:$4 sm:$0x3]
    %s116 = scalar_lea.vmem [#allocation2], 9
    %v117 = vld [vmem:[%s116] ss:$4 sm:$0x3]
    %s118 = scalar_lea.vmem [#allocation2], 17
    %v119 = vld [vmem:[%s118] ss:$4 sm:$0x3]
    %s120 = scalar_lea.vmem [#allocation2], 25
    %v121 = vld [vmem:[%s120] ss:$4 sm:$0x3]
    %s122 = scalar_lea.vmem [#allocation2], 33
    %v123 = vld [vmem:[%s122] ss:$4 sm:$0x3]
    %s124 = scalar_lea.vmem [#allocation2], 41
    %v125 = vld [vmem:[%s124] ss:$4 sm:$0x3]
    %s126 = scalar_lea.vmem [#allocation2], 49
    %v127 = vld [vmem:[%s126] ss:$4 sm:$0x3]
    %s128 = scalar_lea.vmem [#allocation2], 57
    %v129 = vld [vmem:[%s128] ss:$4 sm:$0x3]
    %v130 = vsub.f32 %v99, %v115
    %v131 = vsub.f32 %v101, %v117
    %v132 = vsub.f32 %v103, %v119
    %v133 = vsub.f32 %v105, %v121
    %v134 = vsub.f32 %v107, %v123
    %v135 = vsub.f32 %v109, %v125
    %v136 = vsub.f32 %v111, %v127
    %v137 = vsub.f32 %v113, %v129
    %v138 = vadd.f32 %v99, %v115
    %v139 = vadd.f32 %v101, %v117
    %v140 = vadd.f32 %v103, %v119
    %v141 = vadd.f32 %v105, %v121
    %v142 = vadd.f32 %v107, %v123
    %v143 = vadd.f32 %v109, %v125
    %v144 = vadd.f32 %v111, %v127
    %v145 = vadd.f32 %v113, %v129
    %v154 = vperm.slane %v138, 0
    %v155 = vperm.slane %v138, 1
    %v156 = vperm.slane %v139, 0
    %v157 = vperm.slane %v139, 1
    %v158 = vperm.slane %v140, 0
    %v159 = vperm.slane %v140, 1
    %v160 = vperm.slane %v141, 0
    %v161 = vperm.slane %v141, 1
    %v162 = vperm.slane %v142, 0
    %v163 = vperm.slane %v142, 1
    %v164 = vperm.slane %v143, 0
    %v165 = vperm.slane %v143, 1
    %v166 = vperm.slane %v144, 0
    %v167 = vperm.slane %v144, 1
    %v168 = vperm.slane %v145, 0
    %v169 = vperm.slane %v145, 1
    %v186 = vpack.c.bf16 %v154, %v154
    %v187 = vpack.c.bf16 %v155, %v155
    %v188 = vpack.c.bf16 %v156, %v156
    %v189 = vpack.c.bf16 %v157, %v157
    %v190 = vpack.c.bf16 %v158, %v158
    %v191 = vpack.c.bf16 %v159, %v159
    %v192 = vpack.c.bf16 %v160, %v160
    %v193 = vpack.c.bf16 %v161, %v161
    %v194 = vpack.c.bf16 %v162, %v162
    %v195 = vpack.c.bf16 %v163, %v163
    %v196 = vpack.c.bf16 %v164, %v164
    %v197 = vpack.c.bf16 %v165, %v165
    %v198 = vpack.c.bf16 %v166, %v166
    %v199 = vpack.c.bf16 %v167, %v167
    %v200 = vpack.c.bf16 %v168, %v168
    %v201 = vpack.c.bf16 %v169, %v169
    %v202 = vld [vmem:[#allocation5] sm:$0xf]
    %v203 = vld [vmem:[#allocation5 + $0x4] sm:$0xf]
    %v204 = vld [vmem:[#allocation5 + $0x8] sm:$0xf]
    %v205 = vld [vmem:[#allocation5 + $0xc] sm:$0xf]
    %v206 = vld [vmem:[#allocation5 + $0x10] sm:$0xf]
    %v207 = vld [vmem:[#allocation5 + $0x14] sm:$0xf]
    %v208 = vld [vmem:[#allocation5 + $0x18] sm:$0xf]
    %v209 = vld [vmem:[#allocation5 + $0x1c] sm:$0xf]
    %v210 = vld [vmem:[#allocation5 + $0x20] sm:$0xf]
    %v211 = vld [vmem:[#allocation5 + $0x24] sm:$0xf]
    %v212 = vld [vmem:[#allocation5 + $0x28] sm:$0xf]
    %v213 = vld [vmem:[#allocation5 + $0x2c] sm:$0xf]
    %v214 = vld [vmem:[#allocation5 + $0x30] sm:$0xf]
    %v215 = vld [vmem:[#allocation5 + $0x34] sm:$0xf]
    %v216 = vld [vmem:[#allocation5 + $0x38] sm:$0xf]
    %v217 = vld [vmem:[#allocation5 + $0x3c] sm:$0xf]
    %v218 = vld [vmem:[#allocation5 + $0x40] sm:$0xf]
    %v219 = vld [vmem:[#allocation5 + $0x44] sm:$0xf]
    %v220 = vld [vmem:[#allocation5 + $0x48] sm:$0xf]
    %v221 = vld [vmem:[#allocation5 + $0x4c] sm:$0xf]
    %v222 = vld [vmem:[#allocation5 + $0x50] sm:$0xf]
    %v223 = vld [vmem:[#allocation5 + $0x54] sm:$0xf]
    %v224 = vld [vmem:[#allocation5 + $0x58] sm:$0xf]
    %v225 = vld [vmem:[#allocation5 + $0x5c] sm:$0xf]
    %v226 = vld [vmem:[#allocation5 + $0x60] sm:$0xf]
    %v227 = vld [vmem:[#allocation5 + $0x64] sm:$0xf]
    %v228 = vld [vmem:[#allocation5 + $0x68] sm:$0xf]
    %v229 = vld [vmem:[#allocation5 + $0x6c] sm:$0xf]
    %v230 = vld [vmem:[#allocation5 + $0x70] sm:$0xf]
    %v231 = vld [vmem:[#allocation5 + $0x74] sm:$0xf]
    %v232 = vld [vmem:[#allocation5 + $0x78] sm:$0xf]
    %v233 = vld [vmem:[#allocation5 + $0x7c] sm:$0xf]
    %v234 = vld [vmem:[#allocation7] sm:$0x1]
    %v236 = vperm.slane %v234, 0
    %v254 = vunpack.c.l.b16 %v186
    %v255 = vunpack.c.l.b16 %v187
    %v256 = vunpack.c.l.b16 %v188
    %v257 = vunpack.c.l.b16 %v189
    %v258 = vunpack.c.l.b16 %v190
    %v259 = vunpack.c.l.b16 %v191
    %v260 = vunpack.c.l.b16 %v192
    %v261 = vunpack.c.l.b16 %v193
    %v262 = vunpack.c.l.b16 %v194
    %v263 = vunpack.c.l.b16 %v195
    %v264 = vunpack.c.l.b16 %v196
    %v265 = vunpack.c.l.b16 %v197
    %v266 = vunpack.c.l.b16 %v198
    %v267 = vunpack.c.l.b16 %v199
    %v268 = vunpack.c.l.b16 %v200
    %v269 = vunpack.c.l.b16 %v201
    %v270 = vrot.slane %v256, 7
    %vm271 = vcmask 1041409
    %v272 = vsel %vm271, %v270, %v254
    %v273 = vrot.slane %v258, 6
    %vm274 = vcmask 1042434
    %v275 = vsel %vm274, %v273, %v272
    %v276 = vrot.slane %v260, 5
    %vm277 = vcmask 1043459
    %v278 = vsel %vm277, %v276, %v275
    %v279 = vrot.slane %v262, 4
    %vm280 = vcmask 1044484
    %v281 = vsel %vm280, %v279, %v278
    %v282 = vrot.slane %v264, 3
    %vm283 = vcmask 1045509
    %v284 = vsel %vm283, %v282, %v281
    %v285 = vrot.slane %v266, 2
    %vm286 = vcmask 1046534
    %v287 = vsel %vm286, %v285, %v284
    %v288 = vrot.slane %v268, 1
    %vm289 = vcmask 1047559
    %v290 = vsel %vm289, %v288, %v287
    %v291 = vrot.slane %v257, 7
    %v292 = vsel %vm271, %v291, %v255
    %v293 = vrot.slane %v259, 6
    %v294 = vsel %vm274, %v293, %v292
    %v295 = vrot.slane %v261, 5
    %v296 = vsel %vm277, %v295, %v294
    %v297 = vrot.slane %v263, 4
    %v298 = vsel %vm280, %v297, %v296
    %v299 = vrot.slane %v265, 3
    %v300 = vsel %vm283, %v299, %v298
    %v301 = vrot.slane %v267, 2
    %v302 = vsel %vm286, %v301, %v300
    %v303 = vrot.slane %v269, 1
    %v304 = vsel %vm289, %v303, %v302
    %v305 = vpack.c.b16 %v290, %v290
    %v306 = vpack.c.b16 %v304, %v304
    %v341 = vunpack.c.l.b16 %v202
    %v342 = vunpack.c.l.b16 %v203
    %v343 = vunpack.c.l.b16 %v204
    %v344 = vunpack.c.l.b16 %v205
    %v345 = vunpack.c.l.b16 %v206
    %v346 = vunpack.c.l.b16 %v207
    %v347 = vunpack.c.l.b16 %v208
    %v348 = vunpack.c.l.b16 %v209
    %v349 = vunpack.c.l.b16 %v210
    %v350 = vunpack.c.l.b16 %v211
    %v351 = vunpack.c.l.b16 %v212
    %v352 = vunpack.c.l.b16 %v213
    %v353 = vunpack.c.l.b16 %v214
    %v354 = vunpack.c.l.b16 %v215
    %v355 = vunpack.c.l.b16 %v216
    %v356 = vunpack.c.l.b16 %v217
    %v357 = vunpack.c.l.b16 %v218
    %v358 = vunpack.c.l.b16 %v219
    %v359 = vunpack.c.l.b16 %v220
    %v360 = vunpack.c.l.b16 %v221
    %v361 = vunpack.c.l.b16 %v222
    %v362 = vunpack.c.l.b16 %v223
    %v363 = vunpack.c.l.b16 %v224
    %v364 = vunpack.c.l.b16 %v225
    %v365 = vunpack.c.l.b16 %v226
    %v366 = vunpack.c.l.b16 %v227
    %v367 = vunpack.c.l.b16 %v228
    %v368 = vunpack.c.l.b16 %v229
    %v369 = vunpack.c.l.b16 %v230
    %v370 = vunpack.c.l.b16 %v231
    %v371 = vunpack.c.l.b16 %v232
    %v372 = vunpack.c.l.b16 %v233
    %v373 = vpack.c.b16 %v342, %v341
    %v374 = vpack.c.b16 %v344, %v343
    %v375 = vpack.c.b16 %v346, %v345
    %v376 = vpack.c.b16 %v348, %v347
    %v377 = vpack.c.b16 %v350, %v349
    %v378 = vpack.c.b16 %v352, %v351
    %v379 = vpack.c.b16 %v354, %v353
    %v380 = vpack.c.b16 %v356, %v355
    %v381 = vpack.c.b16 %v358, %v357
    %v382 = vpack.c.b16 %v360, %v359
    %v383 = vpack.c.b16 %v362, %v361
    %v384 = vpack.c.b16 %v364, %v363
    %v385 = vpack.c.b16 %v366, %v365
    %v386 = vpack.c.b16 %v368, %v367
    %v387 = vpack.c.b16 %v370, %v369
    %v388 = vpack.c.b16 %v372, %v371
    %405 = vmatpush.bf16.msra.mxu0 %v380
    %406 = vmatpush.bf16.msra.mxu0 %v379
    %407 = vmatpush.bf16.msra.mxu0 %v378
    %408 = vmatpush.bf16.msra.mxu0 %v377
    %409 = vmatpush.bf16.msra.mxu0 %v376
    %410 = vmatpush.bf16.msra.mxu0 %v375
    %411 = vmatpush.bf16.msra.mxu0 %v374
    %412 = vmatpush.bf16.msra.mxu0 %v373
    %413 = vmatmul.bf16.gmra.mxu0 %v305
    %v414 = vpop.f32.mrf.mxu0
    %v415 = vadd.f32 %v236, %v414
    %v416 = vpop.f32.mrf.mxu0
    %417 = vdwg.mxu0
    %418 = vmatpush.bf16.msra.mxu0 %v388
    %419 = vmatpush.bf16.msra.mxu0 %v387
    %420 = vmatpush.bf16.msra.mxu0 %v386
    %421 = vmatpush.bf16.msra.mxu0 %v385
    %422 = vmatpush.bf16.msra.mxu0 %v384
    %423 = vmatpush.bf16.msra.mxu0 %v383
    %424 = vmatpush.bf16.msra.mxu0 %v382
    %425 = vmatpush.bf16.msra.mxu0 %v381
    %426 = vmatmul.bf16.gmra.mxu0 %v306
    %v427 = vpop.f32.mrf.mxu0
    %v428 = vadd.f32 %v415, %v427
    %v429 = vpop.f32.mrf.mxu0
    %430 = vdwg.mxu0
    %v431 = vmax.f32 %v428, 0.0
    %v432 = vpack.c.bf16 %v431, %v431
    %v433 = vld [vmem:[#allocation8] sm:$0xff]
    %v434 = vld [vmem:[#allocation8 + $0x8] sm:$0xff]
    %v435 = vld [vmem:[#allocation8 + $0x10] sm:$0xff]
    %v436 = vld [vmem:[#allocation8 + $0x18] sm:$0xff]
    %v437 = vld [vmem:[#allocation8 + $0x20] sm:$0xff]
    %v438 = vld [vmem:[#allocation8 + $0x28] sm:$0xff]
    %v439 = vld [vmem:[#allocation8 + $0x30] sm:$0xff]
    %v440 = vld [vmem:[#allocation8 + $0x38] sm:$0xff]
    %v441 = vld [vmem:[#allocation8 + $0x40] sm:$0xff]
    %v442 = vld [vmem:[#allocation8 + $0x48] sm:$0xff]
    %v443 = vld [vmem:[#allocation8 + $0x50] sm:$0xff]
    %v444 = vld [vmem:[#allocation8 + $0x58] sm:$0xff]
    %v445 = vld [vmem:[#allocation8 + $0x60] sm:$0xff]
    %v446 = vld [vmem:[#allocation8 + $0x68] sm:$0xff]
    %v447 = vld [vmem:[#allocation8 + $0x70] sm:$0xff]
    %v448 = vld [vmem:[#allocation8 + $0x78] sm:$0xff]
    %v449 = vld [vmem:[#allocation10] sm:$0x3]
    %v451 = vperm.slane %v449, 0
    %v452 = vperm.slane %v449, 1
    %v471 = vunpack.c.l.b16 %v433
    %v472 = vunpack.c.h.b16 %v433
    %v473 = vunpack.c.l.b16 %v434
    %v474 = vunpack.c.h.b16 %v434
    %v475 = vunpack.c.l.b16 %v435
    %v476 = vunpack.c.h.b16 %v435
    %v477 = vunpack.c.l.b16 %v436
    %v478 = vunpack.c.h.b16 %v436
    %v479 = vunpack.c.l.b16 %v437
    %v480 = vunpack.c.h.b16 %v437
    %v481 = vunpack.c.l.b16 %v438
    %v482 = vunpack.c.h.b16 %v438
    %v483 = vunpack.c.l.b16 %v439
    %v484 = vunpack.c.h.b16 %v439
    %v485 = vunpack.c.l.b16 %v440
    %v486 = vunpack.c.h.b16 %v440
    %v487 = vunpack.c.l.b16 %v441
    %v488 = vunpack.c.h.b16 %v441
    %v489 = vunpack.c.l.b16 %v442
    %v490 = vunpack.c.h.b16 %v442
    %v491 = vunpack.c.l.b16 %v443
    %v492 = vunpack.c.h.b16 %v443
    %v493 = vunpack.c.l.b16 %v444
    %v494 = vunpack.c.h.b16 %v444
    %v495 = vunpack.c.l.b16 %v445
    %v496 = vunpack.c.h.b16 %v445
    %v497 = vunpack.c.l.b16 %v446
    %v498 = vunpack.c.h.b16 %v446
    %v499 = vunpack.c.l.b16 %v447
    %v500 = vunpack.c.h.b16 %v447
    %v501 = vunpack.c.l.b16 %v448
    %v502 = vunpack.c.h.b16 %v448
    %v503 = vpack.c.b16 %v473, %v471
    %v504 = vpack.c.b16 %v474, %v472
    %v505 = vpack.c.b16 %v477, %v475
    %v506 = vpack.c.b16 %v478, %v476
    %v507 = vpack.c.b16 %v481, %v479
    %v508 = vpack.c.b16 %v482, %v480
    %v509 = vpack.c.b16 %v485, %v483
    %v510 = vpack.c.b16 %v486, %v484
    %v511 = vpack.c.b16 %v489, %v487
    %v512 = vpack.c.b16 %v490, %v488
    %v513 = vpack.c.b16 %v493, %v491
    %v514 = vpack.c.b16 %v494, %v492
    %v515 = vpack.c.b16 %v497, %v495
    %v516 = vpack.c.b16 %v498, %v496
    %v517 = vpack.c.b16 %v501, %v499
    %v518 = vpack.c.b16 %v502, %v500
    %535 = vmatpush.bf16.msra.mxu0 %v517
    %536 = vmatpush.bf16.msra.mxu0 %v515
    %537 = vmatpush.bf16.msra.mxu0 %v513
    %538 = vmatpush.bf16.msra.mxu0 %v511
    %539 = vmatpush.bf16.msra.mxu0 %v509
    %540 = vmatpush.bf16.msra.mxu0 %v507
    %541 = vmatpush.bf16.msra.mxu0 %v505
    %542 = vmatpush.bf16.msra.mxu0 %v503
    %543 = vmatmul.bf16.gmra.mxu0 %v432
    %v544 = vpop.f32.mrf.mxu0
    %v545 = vadd.f32 %v451, %v544
    %v546 = vpop.f32.mrf.mxu0
    %547 = vdwg.mxu0
    %548 = vmatpush.bf16.msra.mxu0 %v518
    %549 = vmatpush.bf16.msra.mxu0 %v516
    %550 = vmatpush.bf16.msra.mxu0 %v514
    %551 = vmatpush.bf16.msra.mxu0 %v512
    %552 = vmatpush.bf16.msra.mxu0 %v510
    %553 = vmatpush.bf16.msra.mxu0 %v508
    %554 = vmatpush.bf16.msra.mxu0 %v506
    %555 = vmatpush.bf16.msra.mxu0 %v504
    %556 = vmatmul.bf16.gmra.mxu0 %v432
    %v557 = vpop.f32.mrf.mxu0
    %v558 = vadd.f32 %v452, %v557
    %v559 = vpop.f32.mrf.mxu0
    %560 = vdwg.mxu0
    %v561 = vxor.u32 %v545, 2147483648
    %v562 = vxor.u32 %v558, 2147483648
    %v563 = vmul.f32 %v561, 1.442695
    %v564 = vpow.pop %v563
    %v565 = vmul.f32 %v562, 1.442695
    %v566 = vpow.pop %v565
    %v567 = vadd.f32 %v564, 1.0
    %v568 = vadd.f32 %v566, 1.0
    %v569 = vrcp.pop %v567
    %v570 = vmul.f32 %v567, %v569
    %v571 = vsub.f32 1.0, %v570
    %v572 = vmul.f32 %v569, %v571
    %v573 = vadd.f32 %v569, %v572
    %vm574 = vweird.f32 %v567
    %vm575 = vweird.f32 %v569
    %vm576 = vmor %vm574, %vm575
    %v577 = vsel %vm576, %v569, %v573
    %v578 = vand.u32 2147483647, %v567
    %vm579 = vcmp.eq.f32.partialorder %v578, 8.507059e+37
    %v580 = vand.u32 %v567, 2147483648
    %v581 = vor.u32 1.1754944e-38, %v580
    %v582 = vsel %vm579, %v581, %v577
    %v583 = vmul.f32 1.0, %v582
    %v584 = vrcp.pop %v568
    %v585 = vmul.f32 %v568, %v584
    %v586 = vsub.f32 1.0, %v585
    %v587 = vmul.f32 %v584, %v586
    %v588 = vadd.f32 %v584, %v587
    %vm589 = vweird.f32 %v568
    %vm590 = vweird.f32 %v584
    %vm591 = vmor %vm589, %vm590
    %v592 = vsel %vm591, %v584, %v588
    %v593 = vand.u32 2147483647, %v568
    %vm594 = vcmp.eq.f32.partialorder %v593, 8.507059e+37
    %v595 = vand.u32 %v568, 2147483648
    %v596 = vor.u32 1.1754944e-38, %v595
    %v597 = vsel %vm594, %v596, %v592
    %v598 = vmul.f32 1.0, %v597
    %607 = vst [vmem:[#allocation1] ss:$9 sm:$0xff] %v130
    %s608 = scalar_lea.vmem [#allocation1], 1
    %609 = vst [vmem:[%s608] ss:$9 sm:$0xff] %v131
    %s610 = scalar_lea.vmem [#allocation1], 2
    %611 = vst [vmem:[%s610] ss:$9 sm:$0xff] %v132
    %s612 = scalar_lea.vmem [#allocation1], 3
    %613 = vst [vmem:[%s612] ss:$9 sm:$0xff] %v133
    %s614 = scalar_lea.vmem [#allocation1], 4
    %615 = vst [vmem:[%s614] ss:$9 sm:$0xff] %v134
    %s616 = scalar_lea.vmem [#allocation1], 5
    %617 = vst [vmem:[%s616] ss:$9 sm:$0xff] %v135
    %s618 = scalar_lea.vmem [#allocation1], 6
    %619 = vst [vmem:[%s618] ss:$9 sm:$0xff] %v136
    %s620 = scalar_lea.vmem [#allocation1], 7
    %621 = vst [vmem:[%s620] ss:$9 sm:$0xff] %v137
    %v622 = vld [vmem:[#allocation1] sm:$0xff]
    %v623 = vld [vmem:[#allocation1 + $0x9] sm:$0xff]
    %v626 = vmul.f32 %v583, %v622
    %v627 = vmul.f32 %v598, %v623
    %v630 = vrot.slane %v627, 7
    %vm631 = vcmask 1040384
    %v632 = vsel %vm631, %v626, %v630
    %v633 = vsel %vm271, %v626, %v630
    %v634 = vrot.slane %v633, 1
    %v635 = vsel %vm274, %v626, %v630
    %v636 = vrot.slane %v635, 2
    %v637 = vsel %vm277, %v626, %v630
    %v638 = vrot.slane %v637, 3
    %v639 = vsel %vm280, %v626, %v630
    %v640 = vrot.slane %v639, 4
    %v641 = vsel %vm283, %v626, %v630
    %v642 = vrot.slane %v641, 5
    %v643 = vsel %vm286, %v626, %v630
    %v644 = vrot.slane %v643, 6
    %vm645 = vcmask 1046528
    %v646 = vsel %vm645, %v630, %v626
    %v647 = vrot.slane %v646, 7
    %v656 = vadd.f32 %v115, %v632
    %v657 = vadd.f32 %v117, %v634
    %v658 = vadd.f32 %v119, %v636
    %v659 = vadd.f32 %v121, %v638
    %v660 = vadd.f32 %v123, %v640
    %v661 = vadd.f32 %v125, %v642
    %v662 = vadd.f32 %v127, %v644
    %v663 = vadd.f32 %v129, %v647
    %v672 = vperm.slane %v656, 0
    %v673 = vperm.slane %v656, 1
    %v674 = vperm.slane %v657, 0
    %v675 = vperm.slane %v657, 1
    %v676 = vperm.slane %v658, 0
    %v677 = vperm.slane %v658, 1
    %v678 = vperm.slane %v659, 0
    %v679 = vperm.slane %v659, 1
    %v680 = vperm.slane %v660, 0
    %v681 = vperm.slane %v660, 1
    %v682 = vperm.slane %v661, 0
    %v683 = vperm.slane %v661, 1
    %v684 = vperm.slane %v662, 0
    %v685 = vperm.slane %v662, 1
    %v686 = vperm.slane %v663, 0
    %v687 = vperm.slane %v663, 1
    %v704 = vpack.c.bf16 %v672, %v672
    %v705 = vpack.c.bf16 %v673, %v673
    %v706 = vpack.c.bf16 %v674, %v674
    %v707 = vpack.c.bf16 %v675, %v675
    %v708 = vpack.c.bf16 %v676, %v676
    %v709 = vpack.c.bf16 %v677, %v677
    %v710 = vpack.c.bf16 %v678, %v678
    %v711 = vpack.c.bf16 %v679, %v679
    %v712 = vpack.c.bf16 %v680, %v680
    %v713 = vpack.c.bf16 %v681, %v681
    %v714 = vpack.c.bf16 %v682, %v682
    %v715 = vpack.c.bf16 %v683, %v683
    %v716 = vpack.c.bf16 %v684, %v684
    %v717 = vpack.c.bf16 %v685, %v685
    %v718 = vpack.c.bf16 %v686, %v686
    %v719 = vpack.c.bf16 %v687, %v687
    %s720 = scalar_lea.vmem [#allocation5], 128
    %v721 = vld [vmem:[%s720] sm:$0xf]
    %v722 = vld [vmem:[%s720 + $0x4] sm:$0xf]
    %v723 = vld [vmem:[%s720 + $0x8] sm:$0xf]
    %v724 = vld [vmem:[%s720 + $0xc] sm:$0xf]
    %v725 = vld [vmem:[%s720 + $0x10] sm:$0xf]
    %v726 = vld [vmem:[%s720 + $0x14] sm:$0xf]
    %v727 = vld [vmem:[%s720 + $0x18] sm:$0xf]
    %v728 = vld [vmem:[%s720 + $0x1c] sm:$0xf]
    %v729 = vld [vmem:[%s720 + $0x20] sm:$0xf]
    %v730 = vld [vmem:[%s720 + $0x24] sm:$0xf]
    %v731 = vld [vmem:[%s720 + $0x28] sm:$0xf]
    %v732 = vld [vmem:[%s720 + $0x2c] sm:$0xf]
    %v733 = vld [vmem:[%s720 + $0x30] sm:$0xf]
    %v734 = vld [vmem:[%s720 + $0x34] sm:$0xf]
    %v735 = vld [vmem:[%s720 + $0x38] sm:$0xf]
    %v736 = vld [vmem:[%s720 + $0x3c] sm:$0xf]
    %v737 = vld [vmem:[%s720 + $0x40] sm:$0xf]
    %v738 = vld [vmem:[%s720 + $0x44] sm:$0xf]
    %v739 = vld [vmem:[%s720 + $0x48] sm:$0xf]
    %v740 = vld [vmem:[%s720 + $0x4c] sm:$0xf]
    %v741 = vld [vmem:[%s720 + $0x50] sm:$0xf]
    %v742 = vld [vmem:[%s720 + $0x54] sm:$0xf]
    %v743 = vld [vmem:[%s720 + $0x58] sm:$0xf]
    %v744 = vld [vmem:[%s720 + $0x5c] sm:$0xf]
    %v745 = vld [vmem:[%s720 + $0x60] sm:$0xf]
    %v746 = vld [vmem:[%s720 + $0x64] sm:$0xf]
    %v747 = vld [vmem:[%s720 + $0x68] sm:$0xf]
    %v748 = vld [vmem:[%s720 + $0x6c] sm:$0xf]
    %v749 = vld [vmem:[%s720 + $0x70] sm:$0xf]
    %v750 = vld [vmem:[%s720 + $0x74] sm:$0xf]
    %v751 = vld [vmem:[%s720 + $0x78] sm:$0xf]
    %v752 = vld [vmem:[%s720 + $0x7c] sm:$0xf]
    %s753 = scalar_lea.vmem [#allocation7], 1
    %v754 = vld [vmem:[%s753] sm:$0x1]
    %v756 = vperm.slane %v754, 0
    %v774 = vunpack.c.l.b16 %v704
    %v775 = vunpack.c.l.b16 %v705
    %v776 = vunpack.c.l.b16 %v706
    %v777 = vunpack.c.l.b16 %v707
    %v778 = vunpack.c.l.b16 %v708
    %v779 = vunpack.c.l.b16 %v709
    %v780 = vunpack.c.l.b16 %v710
    %v781 = vunpack.c.l.b16 %v711
    %v782 = vunpack.c.l.b16 %v712
    %v783 = vunpack.c.l.b16 %v713
    %v784 = vunpack.c.l.b16 %v714
    %v785 = vunpack.c.l.b16 %v715
    %v786 = vunpack.c.l.b16 %v716
    %v787 = vunpack.c.l.b16 %v717
    %v788 = vunpack.c.l.b16 %v718
    %v789 = vunpack.c.l.b16 %v719
    %v790 = vrot.slane %v776, 7
    %v791 = vsel %vm271, %v790, %v774
    %v792 = vrot.slane %v778, 6
    %v793 = vsel %vm274, %v792, %v791
    %v794 = vrot.slane %v780, 5
    %v795 = vsel %vm277, %v794, %v793
    %v796 = vrot.slane %v782, 4
    %v797 = vsel %vm280, %v796, %v795
    %v798 = vrot.slane %v784, 3
    %v799 = vsel %vm283, %v798, %v797
    %v800 = vrot.slane %v786, 2
    %v801 = vsel %vm286, %v800, %v799
    %v802 = vrot.slane %v788, 1
    %v803 = vsel %vm289, %v802, %v801
    %v804 = vrot.slane %v777, 7
    %v805 = vsel %vm271, %v804, %v775
    %v806 = vrot.slane %v779, 6
    %v807 = vsel %vm274, %v806, %v805
    %v808 = vrot.slane %v781, 5
    %v809 = vsel %vm277, %v808, %v807
    %v810 = vrot.slane %v783, 4
    %v811 = vsel %vm280, %v810, %v809
    %v812 = vrot.slane %v785, 3
    %v813 = vsel %vm283, %v812, %v811
    %v814 = vrot.slane %v787, 2
    %v815 = vsel %vm286, %v814, %v813
    %v816 = vrot.slane %v789, 1
    %v817 = vsel %vm289, %v816, %v815
    %v818 = vpack.c.b16 %v803, %v803
    %v819 = vpack.c.b16 %v817, %v817
    %v854 = vunpack.c.l.b16 %v721
    %v855 = vunpack.c.l.b16 %v722
    %v856 = vunpack.c.l.b16 %v723
    %v857 = vunpack.c.l.b16 %v724
    %v858 = vunpack.c.l.b16 %v725
    %v859 = vunpack.c.l.b16 %v726
    %v860 = vunpack.c.l.b16 %v727
    %v861 = vunpack.c.l.b16 %v728
    %v862 = vunpack.c.l.b16 %v729
    %v863 = vunpack.c.l.b16 %v730
    %v864 = vunpack.c.l.b16 %v731
    %v865 = vunpack.c.l.b16 %v732
    %v866 = vunpack.c.l.b16 %v733
    %v867 = vunpack.c.l.b16 %v734
    %v868 = vunpack.c.l.b16 %v735
    %v869 = vunpack.c.l.b16 %v736
    %v870 = vunpack.c.l.b16 %v737
    %v871 = vunpack.c.l.b16 %v738
    %v872 = vunpack.c.l.b16 %v739
    %v873 = vunpack.c.l.b16 %v740
    %v874 = vunpack.c.l.b16 %v741
    %v875 = vunpack.c.l.b16 %v742
    %v876 = vunpack.c.l.b16 %v743
    %v877 = vunpack.c.l.b16 %v744
    %v878 = vunpack.c.l.b16 %v745
    %v879 = vunpack.c.l.b16 %v746
    %v880 = vunpack.c.l.b16 %v747
    %v881 = vunpack.c.l.b16 %v748
    %v882 = vunpack.c.l.b16 %v749
    %v883 = vunpack.c.l.b16 %v750
    %v884 = vunpack.c.l.b16 %v751
    %v885 = vunpack.c.l.b16 %v752
    %v886 = vpack.c.b16 %v855, %v854
    %v887 = vpack.c.b16 %v857, %v856
    %v888 = vpack.c.b16 %v859, %v858
    %v889 = vpack.c.b16 %v861, %v860
    %v890 = vpack.c.b16 %v863, %v862
    %v891 = vpack.c.b16 %v865, %v864
    %v892 = vpack.c.b16 %v867, %v866
    %v893 = vpack.c.b16 %v869, %v868
    %v894 = vpack.c.b16 %v871, %v870
    %v895 = vpack.c.b16 %v873, %v872
    %v896 = vpack.c.b16 %v875, %v874
    %v897 = vpack.c.b16 %v877, %v876
    %v898 = vpack.c.b16 %v879, %v878
    %v899 = vpack.c.b16 %v881, %v880
    %v900 = vpack.c.b16 %v883, %v882
    %v901 = vpack.c.b16 %v885, %v884
    %918 = vmatpush.bf16.msra.mxu0 %v893
    %919 = vmatpush.bf16.msra.mxu0 %v892
    %920 = vmatpush.bf16.msra.mxu0 %v891
    %921 = vmatpush.bf16.msra.mxu0 %v890
    %922 = vmatpush.bf16.msra.mxu0 %v889
    %923 = vmatpush.bf16.msra.mxu0 %v888
    %924 = vmatpush.bf16.msra.mxu0 %v887
    %925 = vmatpush.bf16.msra.mxu0 %v886
    %926 = vmatmul.bf16.gmra.mxu0 %v818
    %v927 = vpop.f32.mrf.mxu0
    %v928 = vadd.f32 %v756, %v927
    %v929 = vpop.f32.mrf.mxu0
    %930 = vdwg.mxu0
    %931 = vmatpush.bf16.msra.mxu0 %v901
    %932 = vmatpush.bf16.msra.mxu0 %v900
    %933 = vmatpush.bf16.msra.mxu0 %v899
    %934 = vmatpush.bf16.msra.mxu0 %v898
    %935 = vmatpush.bf16.msra.mxu0 %v897
    %936 = vmatpush.bf16.msra.mxu0 %v896
    %937 = vmatpush.bf16.msra.mxu0 %v895
    %938 = vmatpush.bf16.msra.mxu0 %v894
    %939 = vmatmul.bf16.gmra.mxu0 %v819
    %v940 = vpop.f32.mrf.mxu0
    %v941 = vadd.f32 %v928, %v940
    %v942 = vpop.f32.mrf.mxu0
    %943 = vdwg.mxu0
    %v944 = vmax.f32 %v941, 0.0
    %v945 = vpack.c.bf16 %v944, %v944
    %s946 = scalar_lea.vmem [#allocation8], 128
    %v947 = vld [vmem:[%s946] sm:$0xff]
    %v948 = vld [vmem:[%s946 + $0x8] sm:$0xff]
    %v949 = vld [vmem:[%s946 + $0x10] sm:$0xff]
    %v950 = vld [vmem:[%s946 + $0x18] sm:$0xff]
    %v951 = vld [vmem:[%s946 + $0x20] sm:$0xff]
    %v952 = vld [vmem:[%s946 + $0x28] sm:$0xff]
    %v953 = vld [vmem:[%s946 + $0x30] sm:$0xff]
    %v954 = vld [vmem:[%s946 + $0x38] sm:$0xff]
    %v955 = vld [vmem:[%s946 + $0x40] sm:$0xff]
    %v956 = vld [vmem:[%s946 + $0x48] sm:$0xff]
    %v957 = vld [vmem:[%s946 + $0x50] sm:$0xff]
    %v958 = vld [vmem:[%s946 + $0x58] sm:$0xff]
    %v959 = vld [vmem:[%s946 + $0x60] sm:$0xff]
    %v960 = vld [vmem:[%s946 + $0x68] sm:$0xff]
    %v961 = vld [vmem:[%s946 + $0x70] sm:$0xff]
    %v962 = vld [vmem:[%s946 + $0x78] sm:$0xff]
    %s963 = scalar_lea.vmem [#allocation10], 2
    %v964 = vld [vmem:[%s963] sm:$0x3]
    %v966 = vperm.slane %v964, 0
    %v967 = vperm.slane %v964, 1
    %v986 = vunpack.c.l.b16 %v947
    %v987 = vunpack.c.h.b16 %v947
    %v988 = vunpack.c.l.b16 %v948
    %v989 = vunpack.c.h.b16 %v948
    %v990 = vunpack.c.l.b16 %v949
    %v991 = vunpack.c.h.b16 %v949
    %v992 = vunpack.c.l.b16 %v950
    %v993 = vunpack.c.h.b16 %v950
    %v994 = vunpack.c.l.b16 %v951
    %v995 = vunpack.c.h.b16 %v951
    %v996 = vunpack.c.l.b16 %v952
    %v997 = vunpack.c.h.b16 %v952
    %v998 = vunpack.c.l.b16 %v953
    %v999 = vunpack.c.h.b16 %v953
    %v1000 = vunpack.c.l.b16 %v954
    %v1001 = vunpack.c.h.b16 %v954
    %v1002 = vunpack.c.l.b16 %v955
    %v1003 = vunpack.c.h.b16 %v955
    %v1004 = vunpack.c.l.b16 %v956
    %v1005 = vunpack.c.h.b16 %v956
    %v1006 = vunpack.c.l.b16 %v957
    %v1007 = vunpack.c.h.b16 %v957
    %v1008 = vunpack.c.l.b16 %v958
    %v1009 = vunpack.c.h.b16 %v958
    %v1010 = vunpack.c.l.b16 %v959
    %v1011 = vunpack.c.h.b16 %v959
    %v1012 = vunpack.c.l.b16 %v960
    %v1013 = vunpack.c.h.b16 %v960
    %v1014 = vunpack.c.l.b16 %v961
    %v1015 = vunpack.c.h.b16 %v961
    %v1016 = vunpack.c.l.b16 %v962
    %v1017 = vunpack.c.h.b16 %v962
    %v1018 = vpack.c.b16 %v988, %v986
    %v1019 = vpack.c.b16 %v989, %v987
    %v1020 = vpack.c.b16 %v992, %v990
    %v1021 = vpack.c.b16 %v993, %v991
    %v1022 = vpack.c.b16 %v996, %v994
    %v1023 = vpack.c.b16 %v997, %v995
    %v1024 = vpack.c.b16 %v1000, %v998
    %v1025 = vpack.c.b16 %v1001, %v999
    %v1026 = vpack.c.b16 %v1004, %v1002
    %v1027 = vpack.c.b16 %v1005, %v1003
    %v1028 = vpack.c.b16 %v1008, %v1006
    %v1029 = vpack.c.b16 %v1009, %v1007
    %v1030 = vpack.c.b16 %v1012, %v1010
    %v1031 = vpack.c.b16 %v1013, %v1011
    %v1032 = vpack.c.b16 %v1016, %v1014
    %v1033 = vpack.c.b16 %v1017, %v1015
    %1050 = vmatpush.bf16.msra.mxu0 %v1032
    %1051 = vmatpush.bf16.msra.mxu0 %v1030
    %1052 = vmatpush.bf16.msra.mxu0 %v1028
    %1053 = vmatpush.bf16.msra.mxu0 %v1026
    %1054 = vmatpush.bf16.msra.mxu0 %v1024
    %1055 = vmatpush.bf16.msra.mxu0 %v1022
    %1056 = vmatpush.bf16.msra.mxu0 %v1020
    %1057 = vmatpush.bf16.msra.mxu0 %v1018
    %1058 = vmatmul.bf16.gmra.mxu0 %v945
    %v1059 = vpop.f32.mrf.mxu0
    %v1060 = vadd.f32 %v966, %v1059
    %v1061 = vpop.f32.mrf.mxu0
    %1062 = vdwg.mxu0
    %1063 = vmatpush.bf16.msra.mxu0 %v1033
    %1064 = vmatpush.bf16.msra.mxu0 %v1031
    %1065 = vmatpush.bf16.msra.mxu0 %v1029
    %1066 = vmatpush.bf16.msra.mxu0 %v1027
    %1067 = vmatpush.bf16.msra.mxu0 %v1025
    %1068 = vmatpush.bf16.msra.mxu0 %v1023
    %1069 = vmatpush.bf16.msra.mxu0 %v1021
    %1070 = vmatpush.bf16.msra.mxu0 %v1019
    %1071 = vmatmul.bf16.gmra.mxu0 %v945
    %v1072 = vpop.f32.mrf.mxu0
    %v1073 = vadd.f32 %v967, %v1072
    %v1074 = vpop.f32.mrf.mxu0
    %1075 = vdwg.mxu0
    %v1076 = vxor.u32 %v1060, 2147483648
    %v1077 = vxor.u32 %v1073, 2147483648
    %v1078 = vmul.f32 %v1076, 1.442695
    %v1079 = vpow.pop %v1078
    %v1080 = vmul.f32 %v1077, 1.442695
    %v1081 = vpow.pop %v1080
    %v1082 = vadd.f32 %v1079, 1.0
    %v1083 = vadd.f32 %v1081, 1.0
    %v1084 = vrcp.pop %v1082
    %v1085 = vmul.f32 %v1082, %v1084
    %v1086 = vsub.f32 1.0, %v1085
    %v1087 = vmul.f32 %v1084, %v1086
    %v1088 = vadd.f32 %v1084, %v1087
    %vm1089 = vweird.f32 %v1082
    %vm1090 = vweird.f32 %v1084
    %vm1091 = vmor %vm1089, %vm1090
    %v1092 = vsel %vm1091, %v1084, %v1088
    %v1093 = vand.u32 2147483647, %v1082
    %vm1094 = vcmp.eq.f32.partialorder %v1093, 8.507059e+37
    %v1095 = vand.u32 %v1082, 2147483648
    %v1096 = vor.u32 1.1754944e-38, %v1095
    %v1097 = vsel %vm1094, %v1096, %v1092
    %v1098 = vmul.f32 1.0, %v1097
    %v1099 = vrcp.pop %v1083
    %v1100 = vmul.f32 %v1083, %v1099
    %v1101 = vsub.f32 1.0, %v1100
    %v1102 = vmul.f32 %v1099, %v1101
    %v1103 = vadd.f32 %v1099, %v1102
    %vm1104 = vweird.f32 %v1083
    %vm1105 = vweird.f32 %v1099
    %vm1106 = vmor %vm1104, %vm1105
    %v1107 = vsel %vm1106, %v1099, %v1103
    %v1108 = vand.u32 2147483647, %v1083
    %vm1109 = vcmp.eq.f32.partialorder %v1108, 8.507059e+37
    %v1110 = vand.u32 %v1083, 2147483648
    %v1111 = vor.u32 1.1754944e-38, %v1110
    %v1112 = vsel %vm1109, %v1111, %v1107
    %v1113 = vmul.f32 1.0, %v1112
    %1114 = vst [vmem:[#allocation1] ss:$9 sm:$0xff] %v130
    %s1115 = scalar_lea.vmem [#allocation1], 1
    %1116 = vst [vmem:[%s1115] ss:$9 sm:$0xff] %v131
    %s1117 = scalar_lea.vmem [#allocation1], 2
    %1118 = vst [vmem:[%s1117] ss:$9 sm:$0xff] %v132
    %s1119 = scalar_lea.vmem [#allocation1], 3
    %1120 = vst [vmem:[%s1119] ss:$9 sm:$0xff] %v133
    %s1121 = scalar_lea.vmem [#allocation1], 4
    %1122 = vst [vmem:[%s1121] ss:$9 sm:$0xff] %v134
    %s1123 = scalar_lea.vmem [#allocation1], 5
    %1124 = vst [vmem:[%s1123] ss:$9 sm:$0xff] %v135
    %s1125 = scalar_lea.vmem [#allocation1], 6
    %1126 = vst [vmem:[%s1125] ss:$9 sm:$0xff] %v136
    %s1127 = scalar_lea.vmem [#allocation1], 7
    %1128 = vst [vmem:[%s1127] ss:$9 sm:$0xff] %v137
    %v1129 = vld [vmem:[#allocation1] sm:$0xff]
    %v1130 = vld [vmem:[#allocation1 + $0x9] sm:$0xff]
    %v1133 = vmul.f32 %v1098, %v1129
    %v1134 = vmul.f32 %v1113, %v1130
    %v1137 = vrot.slane %v1134, 7
    %v1138 = vsel %vm631, %v1133, %v1137
    %v1139 = vsel %vm271, %v1133, %v1137
    %v1140 = vrot.slane %v1139, 1
    %v1141 = vsel %vm274, %v1133, %v1137
    %v1142 = vrot.slane %v1141, 2
    %v1143 = vsel %vm277, %v1133, %v1137
    %v1144 = vrot.slane %v1143, 3
    %v1145 = vsel %vm280, %v1133, %v1137
    %v1146 = vrot.slane %v1145, 4
    %v1147 = vsel %vm283, %v1133, %v1137
    %v1148 = vrot.slane %v1147, 5
    %v1149 = vsel %vm286, %v1133, %v1137
    %v1150 = vrot.slane %v1149, 6
    %v1151 = vsel %vm645, %v1137, %v1133
    %v1152 = vrot.slane %v1151, 7
    %v1161 = vadd.f32 %v115, %v1138
    %v1162 = vadd.f32 %v117, %v1140
    %v1163 = vadd.f32 %v119, %v1142
    %v1164 = vadd.f32 %v121, %v1144
    %v1165 = vadd.f32 %v123, %v1146
    %v1166 = vadd.f32 %v125, %v1148
    %v1167 = vadd.f32 %v127, %v1150
    %v1168 = vadd.f32 %v129, %v1152
    %s1169 = scalar_lea.vmem [#allocation2], 2
    %v1170 = vld [vmem:[%s1169] ss:$4 sm:$0x3]
    %s1171 = scalar_lea.vmem [#allocation2], 10
    %v1172 = vld [vmem:[%s1171] ss:$4 sm:$0x3]
    %s1173 = scalar_lea.vmem [#allocation2], 18
    %v1174 = vld [vmem:[%s1173] ss:$4 sm:$0x3]
    %s1175 = scalar_lea.vmem [#allocation2], 26
    %v1176 = vld [vmem:[%s1175] ss:$4 sm:$0x3]
    %s1177 = scalar_lea.vmem [#allocation2], 34
    %v1178 = vld [vmem:[%s1177] ss:$4 sm:$0x3]
    %s1179 = scalar_lea.vmem [#allocation2], 42
    %v1180 = vld [vmem:[%s1179] ss:$4 sm:$0x3]
    %s1181 = scalar_lea.vmem [#allocation2], 50
    %v1182 = vld [vmem:[%s1181] ss:$4 sm:$0x3]
    %s1183 = scalar_lea.vmem [#allocation2], 58
    %v1184 = vld [vmem:[%s1183] ss:$4 sm:$0x3]
    %v1185 = vsub.f32 %v1161, %v1170
    %v1186 = vsub.f32 %v1162, %v1172
    %v1187 = vsub.f32 %v1163, %v1174
    %v1188 = vsub.f32 %v1164, %v1176
    %v1189 = vsub.f32 %v1165, %v1178
    %v1190 = vsub.f32 %v1166, %v1180
    %v1191 = vsub.f32 %v1167, %v1182
    %v1192 = vsub.f32 %v1168, %v1184
    %v1193 = vadd.f32 %v1161, %v1170
    %v1194 = vadd.f32 %v1162, %v1172
    %v1195 = vadd.f32 %v1163, %v1174
    %v1196 = vadd.f32 %v1164, %v1176
    %v1197 = vadd.f32 %v1165, %v1178
    %v1198 = vadd.f32 %v1166, %v1180
    %v1199 = vadd.f32 %v1167, %v1182
    %v1200 = vadd.f32 %v1168, %v1184
    %v1209 = vperm.slane %v1193, 0
    %v1210 = vperm.slane %v1193, 1
    %v1211 = vperm.slane %v1194, 0
    %v1212 = vperm.slane %v1194, 1
    %v1213 = vperm.slane %v1195, 0
    %v1214 = vperm.slane %v1195, 1
    %v1215 = vperm.slane %v1196, 0
    %v1216 = vperm.slane %v1196, 1
    %v1217 = vperm.slane %v1197, 0
    %v1218 = vperm.slane %v1197, 1
    %v1219 = vperm.slane %v1198, 0
    %v1220 = vperm.slane %v1198, 1
    %v1221 = vperm.slane %v1199, 0
    %v1222 = vperm.slane %v1199, 1
    %v1223 = vperm.slane %v1200, 0
    %v1224 = vperm.slane %v1200, 1
    %v1241 = vpack.c.bf16 %v1209, %v1209
    %v1242 = vpack.c.bf16 %v1210, %v1210
    %v1243 = vpack.c.bf16 %v1211, %v1211
    %v1244 = vpack.c.bf16 %v1212, %v1212
    %v1245 = vpack.c.bf16 %v1213, %v1213
    %v1246 = vpack.c.bf16 %v1214, %v1214
    %v1247 = vpack.c.bf16 %v1215, %v1215
    %v1248 = vpack.c.bf16 %v1216, %v1216
    %v1249 = vpack.c.bf16 %v1217, %v1217
    %v1250 = vpack.c.bf16 %v1218, %v1218
    %v1251 = vpack.c.bf16 %v1219, %v1219
    %v1252 = vpack.c.bf16 %v1220, %v1220
    %v1253 = vpack.c.bf16 %v1221, %v1221
    %v1254 = vpack.c.bf16 %v1222, %v1222
    %v1255 = vpack.c.bf16 %v1223, %v1223
    %v1256 = vpack.c.bf16 %v1224, %v1224
    %v1273 = vunpack.c.l.b16 %v1241
    %v1274 = vunpack.c.l.b16 %v1242
    %v1275 = vunpack.c.l.b16 %v1243
    %v1276 = vunpack.c.l.b16 %v1244
    %v1277 = vunpack.c.l.b16 %v1245
    %v1278 = vunpack.c.l.b16 %v1246
    %v1279 = vunpack.c.l.b16 %v1247
    %v1280 = vunpack.c.l.b16 %v1248
    %v1281 = vunpack.c.l.b16 %v1249
    %v1282 = vunpack.c.l.b16 %v1250
    %v1283 = vunpack.c.l.b16 %v1251
    %v1284 = vunpack.c.l.b16 %v1252
    %v1285 = vunpack.c.l.b16 %v1253
    %v1286 = vunpack.c.l.b16 %v1254
    %v1287 = vunpack.c.l.b16 %v1255
    %v1288 = vunpack.c.l.b16 %v1256
    %v1289 = vrot.slane %v1275, 7
    %v1290 = vsel %vm271, %v1289, %v1273
    %v1291 = vrot.slane %v1277, 6
    %v1292 = vsel %vm274, %v1291, %v1290
    %v1293 = vrot.slane %v1279, 5
    %v1294 = vsel %vm277, %v1293, %v1292
    %v1295 = vrot.slane %v1281, 4
    %v1296 = vsel %vm280, %v1295, %v1294
    %v1297 = vrot.slane %v1283, 3
    %v1298 = vsel %vm283, %v1297, %v1296
    %v1299 = vrot.slane %v1285, 2
    %v1300 = vsel %vm286, %v1299, %v1298
    %v1301 = vrot.slane %v1287, 1
    %v1302 = vsel %vm289, %v1301, %v1300
    %v1303 = vrot.slane %v1276, 7
    %v1304 = vsel %vm271, %v1303, %v1274
    %v1305 = vrot.slane %v1278, 6
    %v1306 = vsel %vm274, %v1305, %v1304
    %v1307 = vrot.slane %v1280, 5
    %v1308 = vsel %vm277, %v1307, %v1306
    %v1309 = vrot.slane %v1282, 4
    %v1310 = vsel %vm280, %v1309, %v1308
    %v1311 = vrot.slane %v1284, 3
    %v1312 = vsel %vm283, %v1311, %v1310
    %v1313 = vrot.slane %v1286, 2
    %v1314 = vsel %vm286, %v1313, %v1312
    %v1315 = vrot.slane %v1288, 1
    %v1316 = vsel %vm289, %v1315, %v1314
    %v1317 = vpack.c.b16 %v1302, %v1302
    %v1318 = vpack.c.b16 %v1316, %v1316
    %1321 = vmatpush.bf16.msra.mxu0 %v380
    %1322 = vmatpush.bf16.msra.mxu0 %v379
    %1323 = vmatpush.bf16.msra.mxu0 %v378
    %1324 = vmatpush.bf16.msra.mxu0 %v377
    %1325 = vmatpush.bf16.msra.mxu0 %v376
    %1326 = vmatpush.bf16.msra.mxu0 %v375
    %1327 = vmatpush.bf16.msra.mxu0 %v374
    %1328 = vmatpush.bf16.msra.mxu0 %v373
    %1329 = vmatmul.bf16.gmra.mxu0 %v1317
    %v1330 = vpop.f32.mrf.mxu0
    %v1331 = vadd.f32 %v236, %v1330
    %v1332 = vpop.f32.mrf.mxu0
    %1333 = vdwg.mxu0
    %1334 = vmatpush.bf16.msra.mxu0 %v388
    %1335 = vmatpush.bf16.msra.mxu0 %v387
    %1336 = vmatpush.bf16.msra.mxu0 %v386
    %1337 = vmatpush.bf16.msra.mxu0 %v385
    %1338 = vmatpush.bf16.msra.mxu0 %v384
    %1339 = vmatpush.bf16.msra.mxu0 %v383
    %1340 = vmatpush.bf16.msra.mxu0 %v382
    %1341 = vmatpush.bf16.msra.mxu0 %v381
    %1342 = vmatmul.bf16.gmra.mxu0 %v1318
    %v1343 = vpop.f32.mrf.mxu0
    %v1344 = vadd.f32 %v1331, %v1343
    %v1345 = vpop.f32.mrf.mxu0
    %1346 = vdwg.mxu0
    %v1347 = vmax.f32 %v1344, 0.0
    %v1348 = vpack.c.bf16 %v1347, %v1347
    %1349 = vmatpush.bf16.msra.mxu0 %v517
    %1350 = vmatpush.bf16.msra.mxu0 %v515
    %1351 = vmatpush.bf16.msra.mxu0 %v513
    %1352 = vmatpush.bf16.msra.mxu0 %v511
    %1353 = vmatpush.bf16.msra.mxu0 %v509
    %1354 = vmatpush.bf16.msra.mxu0 %v507
    %1355 = vmatpush.bf16.msra.mxu0 %v505
    %1356 = vmatpush.bf16.msra.mxu0 %v503
    %1357 = vmatmul.bf16.gmra.mxu0 %v1348
    %v1358 = vpop.f32.mrf.mxu0
    %v1359 = vadd.f32 %v451, %v1358
    %v1360 = vpop.f32.mrf.mxu0
    %1361 = vdwg.mxu0
    %1362 = vmatpush.bf16.msra.mxu0 %v518
    %1363 = vmatpush.bf16.msra.mxu0 %v516
    %1364 = vmatpush.bf16.msra.mxu0 %v514
    %1365 = vmatpush.bf16.msra.mxu0 %v512
    %1366 = vmatpush.bf16.msra.mxu0 %v510
    %1367 = vmatpush.bf16.msra.mxu0 %v508
    %1368 = vmatpush.bf16.msra.mxu0 %v506
    %1369 = vmatpush.bf16.msra.mxu0 %v504
    %1370 = vmatmul.bf16.gmra.mxu0 %v1348
    %v1371 = vpop.f32.mrf.mxu0
    %v1372 = vadd.f32 %v452, %v1371
    %v1373 = vpop.f32.mrf.mxu0
    %1374 = vdwg.mxu0
    %v1375 = vxor.u32 %v1359, 2147483648
    %v1376 = vxor.u32 %v1372, 2147483648
    %v1377 = vmul.f32 %v1375, 1.442695
    %v1378 = vpow.pop %v1377
    %v1379 = vmul.f32 %v1376, 1.442695
    %v1380 = vpow.pop %v1379
    %v1381 = vadd.f32 %v1378, 1.0
    %v1382 = vadd.f32 %v1380, 1.0
    %v1383 = vrcp.pop %v1381
    %v1384 = vmul.f32 %v1381, %v1383
    %v1385 = vsub.f32 1.0, %v1384
    %v1386 = vmul.f32 %v1383, %v1385
    %v1387 = vadd.f32 %v1383, %v1386
    %vm1388 = vweird.f32 %v1381
    %vm1389 = vweird.f32 %v1383
    %vm1390 = vmor %vm1388, %vm1389
    %v1391 = vsel %vm1390, %v1383, %v1387
    %v1392 = vand.u32 2147483647, %v1381
    %vm1393 = vcmp.eq.f32.partialorder %v1392, 8.507059e+37
    %v1394 = vand.u32 %v1381, 2147483648
    %v1395 = vor.u32 1.1754944e-38, %v1394
    %v1396 = vsel %vm1393, %v1395, %v1391
    %v1397 = vmul.f32 1.0, %v1396
    %v1398 = vrcp.pop %v1382
    %v1399 = vmul.f32 %v1382, %v1398
    %v1400 = vsub.f32 1.0, %v1399
    %v1401 = vmul.f32 %v1398, %v1400
    %v1402 = vadd.f32 %v1398, %v1401
    %vm1403 = vweird.f32 %v1382
    %vm1404 = vweird.f32 %v1398
    %vm1405 = vmor %vm1403, %vm1404
    %v1406 = vsel %vm1405, %v1398, %v1402
    %v1407 = vand.u32 2147483647, %v1382
    %vm1408 = vcmp.eq.f32.partialorder %v1407, 8.507059e+37
    %v1409 = vand.u32 %v1382, 2147483648
    %v1410 = vor.u32 1.1754944e-38, %v1409
    %v1411 = vsel %vm1408, %v1410, %v1406
    %v1412 = vmul.f32 1.0, %v1411
    %1421 = vst [vmem:[#allocation1] ss:$9 sm:$0xff] %v1185
    %s1422 = scalar_lea.vmem [#allocation1], 1
    %1423 = vst [vmem:[%s1422] ss:$9 sm:$0xff] %v1186
    %s1424 = scalar_lea.vmem [#allocation1], 2
    %1425 = vst [vmem:[%s1424] ss:$9 sm:$0xff] %v1187
    %s1426 = scalar_lea.vmem [#allocation1], 3
    %1427 = vst [vmem:[%s1426] ss:$9 sm:$0xff] %v1188
    %s1428 = scalar_lea.vmem [#allocation1], 4
    %1429 = vst [vmem:[%s1428] ss:$9 sm:$0xff] %v1189
    %s1430 = scalar_lea.vmem [#allocation1], 5
    %1431 = vst [vmem:[%s1430] ss:$9 sm:$0xff] %v1190
    %s1432 = scalar_lea.vmem [#allocation1], 6
    %1433 = vst [vmem:[%s1432] ss:$9 sm:$0xff] %v1191
    %s1434 = scalar_lea.vmem [#allocation1], 7
    %1435 = vst [vmem:[%s1434] ss:$9 sm:$0xff] %v1192
    %v1436 = vld [vmem:[#allocation1] sm:$0xff]
    %v1437 = vld [vmem:[#allocation1 + $0x9] sm:$0xff]
    %v1440 = vmul.f32 %v1397, %v1436
    %v1441 = vmul.f32 %v1412, %v1437
    %v1444 = vrot.slane %v1441, 7
    %v1445 = vsel %vm631, %v1440, %v1444
    %v1446 = vsel %vm271, %v1440, %v1444
    %v1447 = vrot.slane %v1446, 1
    %v1448 = vsel %vm274, %v1440, %v1444
    %v1449 = vrot.slane %v1448, 2
    %v1450 = vsel %vm277, %v1440, %v1444
    %v1451 = vrot.slane %v1450, 3
    %v1452 = vsel %vm280, %v1440, %v1444
    %v1453 = vrot.slane %v1452, 4
    %v1454 = vsel %vm283, %v1440, %v1444
    %v1455 = vrot.slane %v1454, 5
    %v1456 = vsel %vm286, %v1440, %v1444
    %v1457 = vrot.slane %v1456, 6
    %v1458 = vsel %vm645, %v1444, %v1440
    %v1459 = vrot.slane %v1458, 7
    %v1468 = vadd.f32 %v1170, %v1445
    %v1469 = vadd.f32 %v1172, %v1447
    %v1470 = vadd.f32 %v1174, %v1449
    %v1471 = vadd.f32 %v1176, %v1451
    %v1472 = vadd.f32 %v1178, %v1453
    %v1473 = vadd.f32 %v1180, %v1455
    %v1474 = vadd.f32 %v1182, %v1457
    %v1475 = vadd.f32 %v1184, %v1459
    %v1484 = vperm.slane %v1468, 0
    %v1485 = vperm.slane %v1468, 1
    %v1486 = vperm.slane %v1469, 0
    %v1487 = vperm.slane %v1469, 1
    %v1488 = vperm.slane %v1470, 0
    %v1489 = vperm.slane %v1470, 1
    %v1490 = vperm.slane %v1471, 0
    %v1491 = vperm.slane %v1471, 1
    %v1492 = vperm.slane %v1472, 0
    %v1493 = vperm.slane %v1472, 1
    %v1494 = vperm.slane %v1473, 0
    %v1495 = vperm.slane %v1473, 1
    %v1496 = vperm.slane %v1474, 0
    %v1497 = vperm.slane %v1474, 1
    %v1498 = vperm.slane %v1475, 0
    %v1499 = vperm.slane %v1475, 1
    %v1516 = vpack.c.bf16 %v1484, %v1484
    %v1517 = vpack.c.bf16 %v1485, %v1485
    %v1518 = vpack.c.bf16 %v1486, %v1486
    %v1519 = vpack.c.bf16 %v1487, %v1487
    %v1520 = vpack.c.bf16 %v1488, %v1488
    %v1521 = vpack.c.bf16 %v1489, %v1489
    %v1522 = vpack.c.bf16 %v1490, %v1490
    %v1523 = vpack.c.bf16 %v1491, %v1491
    %v1524 = vpack.c.bf16 %v1492, %v1492
    %v1525 = vpack.c.bf16 %v1493, %v1493
    %v1526 = vpack.c.bf16 %v1494, %v1494
    %v1527 = vpack.c.bf16 %v1495, %v1495
    %v1528 = vpack.c.bf16 %v1496, %v1496
    %v1529 = vpack.c.bf16 %v1497, %v1497
    %v1530 = vpack.c.bf16 %v1498, %v1498
    %v1531 = vpack.c.bf16 %v1499, %v1499
    %v1548 = vunpack.c.l.b16 %v1516
    %v1549 = vunpack.c.l.b16 %v1517
    %v1550 = vunpack.c.l.b16 %v1518
    %v1551 = vunpack.c.l.b16 %v1519
    %v1552 = vunpack.c.l.b16 %v1520
    %v1553 = vunpack.c.l.b16 %v1521
    %v1554 = vunpack.c.l.b16 %v1522
    %v1555 = vunpack.c.l.b16 %v1523
    %v1556 = vunpack.c.l.b16 %v1524
    %v1557 = vunpack.c.l.b16 %v1525
    %v1558 = vunpack.c.l.b16 %v1526
    %v1559 = vunpack.c.l.b16 %v1527
    %v1560 = vunpack.c.l.b16 %v1528
    %v1561 = vunpack.c.l.b16 %v1529
    %v1562 = vunpack.c.l.b16 %v1530
    %v1563 = vunpack.c.l.b16 %v1531
    %v1564 = vrot.slane %v1550, 7
    %v1565 = vsel %vm271, %v1564, %v1548
    %v1566 = vrot.slane %v1552, 6
    %v1567 = vsel %vm274, %v1566, %v1565
    %v1568 = vrot.slane %v1554, 5
    %v1569 = vsel %vm277, %v1568, %v1567
    %v1570 = vrot.slane %v1556, 4
    %v1571 = vsel %vm280, %v1570, %v1569
    %v1572 = vrot.slane %v1558, 3
    %v1573 = vsel %vm283, %v1572, %v1571
    %v1574 = vrot.slane %v1560, 2
    %v1575 = vsel %vm286, %v1574, %v1573
    %v1576 = vrot.slane %v1562, 1
    %v1577 = vsel %vm289, %v1576, %v1575
    %v1578 = vrot.slane %v1551, 7
    %v1579 = vsel %vm271, %v1578, %v1549
    %v1580 = vrot.slane %v1553, 6
    %v1581 = vsel %vm274, %v1580, %v1579
    %v1582 = vrot.slane %v1555, 5
    %v1583 = vsel %vm277, %v1582, %v1581
    %v1584 = vrot.slane %v1557, 4
    %v1585 = vsel %vm280, %v1584, %v1583
    %v1586 = vrot.slane %v1559, 3
    %v1587 = vsel %vm283, %v1586, %v1585
    %v1588 = vrot.slane %v1561, 2
    %v1589 = vsel %vm286, %v1588, %v1587
    %v1590 = vrot.slane %v1563, 1
    %v1591 = vsel %vm289, %v1590, %v1589
    %v1592 = vpack.c.b16 %v1577, %v1577
    %v1593 = vpack.c.b16 %v1591, %v1591
    %1596 = vmatpush.bf16.msra.mxu0 %v893
    %1597 = vmatpush.bf16.msra.mxu0 %v892
    %1598 = vmatpush.bf16.msra.mxu0 %v891
    %1599 = vmatpush.bf16.msra.mxu0 %v890
    %1600 = vmatpush.bf16.msra.mxu0 %v889
    %1601 = vmatpush.bf16.msra.mxu0 %v888
    %1602 = vmatpush.bf16.msra.mxu0 %v887
    %1603 = vmatpush.bf16.msra.mxu0 %v886
    %1604 = vmatmul.bf16.gmra.mxu0 %v1592
    %v1605 = vpop.f32.mrf.mxu0
    %v1606 = vadd.f32 %v756, %v1605
    %v1607 = vpop.f32.mrf.mxu0
    %1608 = vdwg.mxu0
    %1609 = vmatpush.bf16.msra.mxu0 %v901
    %1610 = vmatpush.bf16.msra.mxu0 %v900
    %1611 = vmatpush.bf16.msra.mxu0 %v899
    %1612 = vmatpush.bf16.msra.mxu0 %v898
    %1613 = vmatpush.bf16.msra.mxu0 %v897
    %1614 = vmatpush.bf16.msra.mxu0 %v896
    %1615 = vmatpush.bf16.msra.mxu0 %v895
    %1616 = vmatpush.bf16.msra.mxu0 %v894
    %1617 = vmatmul.bf16.gmra.mxu0 %v1593
    %v1618 = vpop.f32.mrf.mxu0
    %v1619 = vadd.f32 %v1606, %v1618
    %v1620 = vpop.f32.mrf.mxu0
    %1621 = vdwg.mxu0
    %v1622 = vmax.f32 %v1619, 0.0
    %v1623 = vpack.c.bf16 %v1622, %v1622
    %1624 = vmatpush.bf16.msra.mxu0 %v1032
    %1625 = vmatpush.bf16.msra.mxu0 %v1030
    %1626 = vmatpush.bf16.msra.mxu0 %v1028
    %1627 = vmatpush.bf16.msra.mxu0 %v1026
    %1628 = vmatpush.bf16.msra.mxu0 %v1024
    %1629 = vmatpush.bf16.msra.mxu0 %v1022
    %1630 = vmatpush.bf16.msra.mxu0 %v1020
    %1631 = vmatpush.bf16.msra.mxu0 %v1018
    %1632 = vmatmul.bf16.gmra.mxu0 %v1623
    %v1633 = vpop.f32.mrf.mxu0
    %v1634 = vadd.f32 %v966, %v1633
    %v1635 = vpop.f32.mrf.mxu0
    %1636 = vdwg.mxu0
    %1637 = vmatpush.bf16.msra.mxu0 %v1033
    %1638 = vmatpush.bf16.msra.mxu0 %v1031
    %1639 = vmatpush.bf16.msra.mxu0 %v1029
    %1640 = vmatpush.bf16.msra.mxu0 %v1027
    %1641 = vmatpush.bf16.msra.mxu0 %v1025
    %1642 = vmatpush.bf16.msra.mxu0 %v1023
    %1643 = vmatpush.bf16.msra.mxu0 %v1021
    %1644 = vmatpush.bf16.msra.mxu0 %v1019
    %1645 = vmatmul.bf16.gmra.mxu0 %v1623
    %v1646 = vpop.f32.mrf.mxu0
    %v1647 = vadd.f32 %v967, %v1646
    %v1648 = vpop.f32.mrf.mxu0
    %1649 = vdwg.mxu0
    %v1650 = vxor.u32 %v1634, 2147483648
    %v1651 = vxor.u32 %v1647, 2147483648
    %v1652 = vmul.f32 %v1650, 1.442695
    %v1653 = vpow.pop %v1652
    %v1654 = vmul.f32 %v1651, 1.442695
    %v1655 = vpow.pop %v1654
    %v1656 = vadd.f32 %v1653, 1.0
    %v1657 = vadd.f32 %v1655, 1.0
    %v1658 = vrcp.pop %v1656
    %v1659 = vmul.f32 %v1656, %v1658
    %v1660 = vsub.f32 1.0, %v1659
    %v1661 = vmul.f32 %v1658, %v1660
    %v1662 = vadd.f32 %v1658, %v1661
    %vm1663 = vweird.f32 %v1656
    %vm1664 = vweird.f32 %v1658
    %vm1665 = vmor %vm1663, %vm1664
    %v1666 = vsel %vm1665, %v1658, %v1662
    %v1667 = vand.u32 2147483647, %v1656
    %vm1668 = vcmp.eq.f32.partialorder %v1667, 8.507059e+37
    %v1669 = vand.u32 %v1656, 2147483648
    %v1670 = vor.u32 1.1754944e-38, %v1669
    %v1671 = vsel %vm1668, %v1670, %v1666
    %v1672 = vmul.f32 1.0, %v1671
    %v1673 = vrcp.pop %v1657
    %v1674 = vmul.f32 %v1657, %v1673
    %v1675 = vsub.f32 1.0, %v1674
    %v1676 = vmul.f32 %v1673, %v1675
    %v1677 = vadd.f32 %v1673, %v1676
    %vm1678 = vweird.f32 %v1657
    %vm1679 = vweird.f32 %v1673
    %vm1680 = vmor %vm1678, %vm1679
    %v1681 = vsel %vm1680, %v1673, %v1677
    %v1682 = vand.u32 2147483647, %v1657
    %vm1683 = vcmp.eq.f32.partialorder %v1682, 8.507059e+37
    %v1684 = vand.u32 %v1657, 2147483648
    %v1685 = vor.u32 1.1754944e-38, %v1684
    %v1686 = vsel %vm1683, %v1685, %v1681
    %v1687 = vmul.f32 1.0, %v1686
    %1688 = vst [vmem:[#allocation1] ss:$9 sm:$0xff] %v1185
    %s1689 = scalar_lea.vmem [#allocation1], 1
    %1690 = vst [vmem:[%s1689] ss:$9 sm:$0xff] %v1186
    %s1691 = scalar_lea.vmem [#allocation1], 2
    %1692 = vst [vmem:[%s1691] ss:$9 sm:$0xff] %v1187
    %s1693 = scalar_lea.vmem [#allocation1], 3
    %1694 = vst [vmem:[%s1693] ss:$9 sm:$0xff] %v1188
    %s1695 = scalar_lea.vmem [#allocation1], 4
    %1696 = vst [vmem:[%s1695] ss:$9 sm:$0xff] %v1189
    %s1697 = scalar_lea.vmem [#allocation1], 5
    %1698 = vst [vmem:[%s1697] ss:$9 sm:$0xff] %v1190
    %s1699 = scalar_lea.vmem [#allocation1], 6
    %1700 = vst [vmem:[%s1699] ss:$9 sm:$0xff] %v1191
    %s1701 = scalar_lea.vmem [#allocation1], 7
    %1702 = vst [vmem:[%s1701] ss:$9 sm:$0xff] %v1192
    %v1703 = vld [vmem:[#allocation1] sm:$0xff]
    %v1704 = vld [vmem:[#allocation1 + $0x9] sm:$0xff]
    %v1707 = vmul.f32 %v1672, %v1703
    %v1708 = vmul.f32 %v1687, %v1704
    %v1711 = vrot.slane %v1708, 7
    %v1712 = vsel %vm631, %v1707, %v1711
    %v1713 = vsel %vm271, %v1707, %v1711
    %v1714 = vrot.slane %v1713, 1
    %v1715 = vsel %vm274, %v1707, %v1711
    %v1716 = vrot.slane %v1715, 2
    %v1717 = vsel %vm277, %v1707, %v1711
    %v1718 = vrot.slane %v1717, 3
    %v1719 = vsel %vm280, %v1707, %v1711
    %v1720 = vrot.slane %v1719, 4
    %v1721 = vsel %vm283, %v1707, %v1711
    %v1722 = vrot.slane %v1721, 5
    %v1723 = vsel %vm286, %v1707, %v1711
    %v1724 = vrot.slane %v1723, 6
    %v1725 = vsel %vm645, %v1711, %v1707
    %v1726 = vrot.slane %v1725, 7
    %v1735 = vadd.f32 %v1170, %v1712
    %v1736 = vadd.f32 %v1172, %v1714
    %v1737 = vadd.f32 %v1174, %v1716
    %v1738 = vadd.f32 %v1176, %v1718
    %v1739 = vadd.f32 %v1178, %v1720
    %v1740 = vadd.f32 %v1180, %v1722
    %v1741 = vadd.f32 %v1182, %v1724
    %v1742 = vadd.f32 %v1184, %v1726
    %s1743 = scalar_lea.vmem [#allocation2], 3
    %v1744 = vld [vmem:[%s1743] ss:$4 sm:$0x3]
    %s1745 = scalar_lea.vmem [#allocation2], 11
    %v1746 = vld [vmem:[%s1745] ss:$4 sm:$0x3]
    %s1747 = scalar_lea.vmem [#allocation2], 19
    %v1748 = vld [vmem:[%s1747] ss:$4 sm:$0x3]
    %s1749 = scalar_lea.vmem [#allocation2], 27
    %v1750 = vld [vmem:[%s1749] ss:$4 sm:$0x3]
    %s1751 = scalar_lea.vmem [#allocation2], 35
    %v1752 = vld [vmem:[%s1751] ss:$4 sm:$0x3]
    %s1753 = scalar_lea.vmem [#allocation2], 43
    %v1754 = vld [vmem:[%s1753] ss:$4 sm:$0x3]
    %s1755 = scalar_lea.vmem [#allocation2], 51
    %v1756 = vld [vmem:[%s1755] ss:$4 sm:$0x3]
    %s1757 = scalar_lea.vmem [#allocation2], 59
    %v1758 = vld [vmem:[%s1757] ss:$4 sm:$0x3]
    %v1759 = vsub.f32 %v1735, %v1744
    %v1760 = vsub.f32 %v1736, %v1746
    %v1761 = vsub.f32 %v1737, %v1748
    %v1762 = vsub.f32 %v1738, %v1750
    %v1763 = vsub.f32 %v1739, %v1752
    %v1764 = vsub.f32 %v1740, %v1754
    %v1765 = vsub.f32 %v1741, %v1756
    %v1766 = vsub.f32 %v1742, %v1758
    %v1767 = vadd.f32 %v1735, %v1744
    %v1768 = vadd.f32 %v1736, %v1746
    %v1769 = vadd.f32 %v1737, %v1748
    %v1770 = vadd.f32 %v1738, %v1750
    %v1771 = vadd.f32 %v1739, %v1752
    %v1772 = vadd.f32 %v1740, %v1754
    %v1773 = vadd.f32 %v1741, %v1756
    %v1774 = vadd.f32 %v1742, %v1758
    %v1783 = vperm.slane %v1767, 0
    %v1784 = vperm.slane %v1767, 1
    %v1785 = vperm.slane %v1768, 0
    %v1786 = vperm.slane %v1768, 1
    %v1787 = vperm.slane %v1769, 0
    %v1788 = vperm.slane %v1769, 1
    %v1789 = vperm.slane %v1770, 0
    %v1790 = vperm.slane %v1770, 1
    %v1791 = vperm.slane %v1771, 0
    %v1792 = vperm.slane %v1771, 1
    %v1793 = vperm.slane %v1772, 0
    %v1794 = vperm.slane %v1772, 1
    %v1795 = vperm.slane %v1773, 0
    %v1796 = vperm.slane %v1773, 1
    %v1797 = vperm.slane %v1774, 0
    %v1798 = vperm.slane %v1774, 1
    %v1815 = vpack.c.bf16 %v1783, %v1783
    %v1816 = vpack.c.bf16 %v1784, %v1784
    %v1817 = vpack.c.bf16 %v1785, %v1785
    %v1818 = vpack.c.bf16 %v1786, %v1786
    %v1819 = vpack.c.bf16 %v1787, %v1787
    %v1820 = vpack.c.bf16 %v1788, %v1788
    %v1821 = vpack.c.bf16 %v1789, %v1789
    %v1822 = vpack.c.bf16 %v1790, %v1790
    %v1823 = vpack.c.bf16 %v1791, %v1791
    %v1824 = vpack.c.bf16 %v1792, %v1792
    %v1825 = vpack.c.bf16 %v1793, %v1793
    %v1826 = vpack.c.bf16 %v1794, %v1794
    %v1827 = vpack.c.bf16 %v1795, %v1795
    %v1828 = vpack.c.bf16 %v1796, %v1796
    %v1829 = vpack.c.bf16 %v1797, %v1797
    %v1830 = vpack.c.bf16 %v1798, %v1798
    %v1847 = vunpack.c.l.b16 %v1815
    %v1848 = vunpack.c.l.b16 %v1816
    %v1849 = vunpack.c.l.b16 %v1817
    %v1850 = vunpack.c.l.b16 %v1818
    %v1851 = vunpack.c.l.b16 %v1819
    %v1852 = vunpack.c.l.b16 %v1820
    %v1853 = vunpack.c.l.b16 %v1821
    %v1854 = vunpack.c.l.b16 %v1822
    %v1855 = vunpack.c.l.b16 %v1823
    %v1856 = vunpack.c.l.b16 %v1824
    %v1857 = vunpack.c.l.b16 %v1825
    %v1858 = vunpack.c.l.b16 %v1826
    %v1859 = vunpack.c.l.b16 %v1827
    %v1860 = vunpack.c.l.b16 %v1828
    %v1861 = vunpack.c.l.b16 %v1829
    %v1862 = vunpack.c.l.b16 %v1830
    %v1863 = vrot.slane %v1849, 7
    %v1864 = vsel %vm271, %v1863, %v1847
    %v1865 = vrot.slane %v1851, 6
    %v1866 = vsel %vm274, %v1865, %v1864
    %v1867 = vrot.slane %v1853, 5
    %v1868 = vsel %vm277, %v1867, %v1866
    %v1869 = vrot.slane %v1855, 4
    %v1870 = vsel %vm280, %v1869, %v1868
    %v1871 = vrot.slane %v1857, 3
    %v1872 = vsel %vm283, %v1871, %v1870
    %v1873 = vrot.slane %v1859, 2
    %v1874 = vsel %vm286, %v1873, %v1872
    %v1875 = vrot.slane %v1861, 1
    %v1876 = vsel %vm289, %v1875, %v1874
    %v1877 = vrot.slane %v1850, 7
    %v1878 = vsel %vm271, %v1877, %v1848
    %v1879 = vrot.slane %v1852, 6
    %v1880 = vsel %vm274, %v1879, %v1878
    %v1881 = vrot.slane %v1854, 5
    %v1882 = vsel %vm277, %v1881, %v1880
    %v1883 = vrot.slane %v1856, 4
    %v1884 = vsel %vm280, %v1883, %v1882
    %v1885 = vrot.slane %v1858, 3
    %v1886 = vsel %vm283, %v1885, %v1884
    %v1887 = vrot.slane %v1860, 2
    %v1888 = vsel %vm286, %v1887, %v1886
    %v1889 = vrot.slane %v1862, 1
    %v1890 = vsel %vm289, %v1889, %v1888
    %v1891 = vpack.c.b16 %v1876, %v1876
    %v1892 = vpack.c.b16 %v1890, %v1890
    %1895 = vmatpush.bf16.msra.mxu0 %v380
    %1896 = vmatpush.bf16.msra.mxu0 %v379
    %1897 = vmatpush.bf16.msra.mxu0 %v378
    %1898 = vmatpush.bf16.msra.mxu0 %v377
    %1899 = vmatpush.bf16.msra.mxu0 %v376
    %1900 = vmatpush.bf16.msra.mxu0 %v375
    %1901 = vmatpush.bf16.msra.mxu0 %v374
    %1902 = vmatpush.bf16.msra.mxu0 %v373
    %1903 = vmatmul.bf16.gmra.mxu0 %v1891
    %v1904 = vpop.f32.mrf.mxu0
    %v1905 = vadd.f32 %v236, %v1904
    %v1906 = vpop.f32.mrf.mxu0
    %1907 = vdwg.mxu0
    %1908 = vmatpush.bf16.msra.mxu0 %v388
    %1909 = vmatpush.bf16.msra.mxu0 %v387
    %1910 = vmatpush.bf16.msra.mxu0 %v386
    %1911 = vmatpush.bf16.msra.mxu0 %v385
    %1912 = vmatpush.bf16.msra.mxu0 %v384
    %1913 = vmatpush.bf16.msra.mxu0 %v383
    %1914 = vmatpush.bf16.msra.mxu0 %v382
    %1915 = vmatpush.bf16.msra.mxu0 %v381
    %1916 = vmatmul.bf16.gmra.mxu0 %v1892
    %v1917 = vpop.f32.mrf.mxu0
    %v1918 = vadd.f32 %v1905, %v1917
    %v1919 = vpop.f32.mrf.mxu0
    %1920 = vdwg.mxu0
    %v1921 = vmax.f32 %v1918, 0.0
    %v1922 = vpack.c.bf16 %v1921, %v1921
    %1923 = vmatpush.bf16.msra.mxu0 %v517
    %1924 = vmatpush.bf16.msra.mxu0 %v515
    %1925 = vmatpush.bf16.msra.mxu0 %v513
    %1926 = vmatpush.bf16.msra.mxu0 %v511
    %1927 = vmatpush.bf16.msra.mxu0 %v509
    %1928 = vmatpush.bf16.msra.mxu0 %v507
    %1929 = vmatpush.bf16.msra.mxu0 %v505
    %1930 = vmatpush.bf16.msra.mxu0 %v503
    %1931 = vmatmul.bf16.gmra.mxu0 %v1922
    %v1932 = vpop.f32.mrf.mxu0
    %v1933 = vadd.f32 %v451, %v1932
    %v1934 = vpop.f32.mrf.mxu0
    %1935 = vdwg.mxu0
    %1936 = vmatpush.bf16.msra.mxu0 %v518
    %1937 = vmatpush.bf16.msra.mxu0 %v516
    %1938 = vmatpush.bf16.msra.mxu0 %v514
    %1939 = vmatpush.bf16.msra.mxu0 %v512
    %1940 = vmatpush.bf16.msra.mxu0 %v510
    %1941 = vmatpush.bf16.msra.mxu0 %v508
    %1942 = vmatpush.bf16.msra.mxu0 %v506
    %1943 = vmatpush.bf16.msra.mxu0 %v504
    %1944 = vmatmul.bf16.gmra.mxu0 %v1922
    %v1945 = vpop.f32.mrf.mxu0
    %v1946 = vadd.f32 %v452, %v1945
    %v1947 = vpop.f32.mrf.mxu0
    %1948 = vdwg.mxu0
    %v1949 = vxor.u32 %v1933, 2147483648
    %v1950 = vxor.u32 %v1946, 2147483648
    %v1951 = vmul.f32 %v1949, 1.442695
    %v1952 = vpow.pop %v1951
    %v1953 = vmul.f32 %v1950, 1.442695
    %v1954 = vpow.pop %v1953
    %v1955 = vadd.f32 %v1952, 1.0
    %v1956 = vadd.f32 %v1954, 1.0
    %v1957 = vrcp.pop %v1955
    %v1958 = vmul.f32 %v1955, %v1957
    %v1959 = vsub.f32 1.0, %v1958
    %v1960 = vmul.f32 %v1957, %v1959
    %v1961 = vadd.f32 %v1957, %v1960
    %vm1962 = vweird.f32 %v1955
    %vm1963 = vweird.f32 %v1957
    %vm1964 = vmor %vm1962, %vm1963
    %v1965 = vsel %vm1964, %v1957, %v1961
    %v1966 = vand.u32 2147483647, %v1955
    %vm1967 = vcmp.eq.f32.partialorder %v1966, 8.507059e+37
    %v1968 = vand.u32 %v1955, 2147483648
    %v1969 = vor.u32 1.1754944e-38, %v1968
    %v1970 = vsel %vm1967, %v1969, %v1965
    %v1971 = vmul.f32 1.0, %v1970
    %v1972 = vrcp.pop %v1956
    %v1973 = vmul.f32 %v1956, %v1972
    %v1974 = vsub.f32 1.0, %v1973
    %v1975 = vmul.f32 %v1972, %v1974
    %v1976 = vadd.f32 %v1972, %v1975
    %vm1977 = vweird.f32 %v1956
    %vm1978 = vweird.f32 %v1972
    %vm1979 = vmor %vm1977, %vm1978
    %v1980 = vsel %vm1979, %v1972, %v1976
    %v1981 = vand.u32 2147483647, %v1956
    %vm1982 = vcmp.eq.f32.partialorder %v1981, 8.507059e+37
    %v1983 = vand.u32 %v1956, 2147483648
    %v1984 = vor.u32 1.1754944e-38, %v1983
    %v1985 = vsel %vm1982, %v1984, %v1980
    %v1986 = vmul.f32 1.0, %v1985
    %1995 = vst [vmem:[#allocation1] ss:$9 sm:$0xff] %v1759
    %s1996 = scalar_lea.vmem [#allocation1], 1
    %1997 = vst [vmem:[%s1996] ss:$9 sm:$0xff] %v1760
    %s1998 = scalar_lea.vmem [#allocation1], 2
    %1999 = vst [vmem:[%s1998] ss:$9 sm:$0xff] %v1761
    %s2000 = scalar_lea.vmem [#allocation1], 3
    %2001 = vst [vmem:[%s2000] ss:$9 sm:$0xff] %v1762
    %s2002 = scalar_lea.vmem [#allocation1], 4
    %2003 = vst [vmem:[%s2002] ss:$9 sm:$0xff] %v1763
    %s2004 = scalar_lea.vmem [#allocation1], 5
    %2005 = vst [vmem:[%s2004] ss:$9 sm:$0xff] %v1764
    %s2006 = scalar_lea.vmem [#allocation1], 6
    %2007 = vst [vmem:[%s2006] ss:$9 sm:$0xff] %v1765
    %s2008 = scalar_lea.vmem [#allocation1], 7
    %2009 = vst [vmem:[%s2008] ss:$9 sm:$0xff] %v1766
    %v2010 = vld [vmem:[#allocation1] sm:$0xff]
    %v2011 = vld [vmem:[#allocation1 + $0x9] sm:$0xff]
    %v2014 = vmul.f32 %v1971, %v2010
    %v2015 = vmul.f32 %v1986, %v2011
    %v2018 = vrot.slane %v2015, 7
    %v2019 = vsel %vm631, %v2014, %v2018
    %v2020 = vsel %vm271, %v2014, %v2018
    %v2021 = vrot.slane %v2020, 1
    %v2022 = vsel %vm274, %v2014, %v2018
    %v2023 = vrot.slane %v2022, 2
    %v2024 = vsel %vm277, %v2014, %v2018
    %v2025 = vrot.slane %v2024, 3
    %v2026 = vsel %vm280, %v2014, %v2018
    %v2027 = vrot.slane %v2026, 4
    %v2028 = vsel %vm283, %v2014, %v2018
    %v2029 = vrot.slane %v2028, 5
    %v2030 = vsel %vm286, %v2014, %v2018
    %v2031 = vrot.slane %v2030, 6
    %v2032 = vsel %vm645, %v2018, %v2014
    %v2033 = vrot.slane %v2032, 7
    %v2042 = vadd.f32 %v1744, %v2019
    %v2043 = vadd.f32 %v1746, %v2021
    %v2044 = vadd.f32 %v1748, %v2023
    %v2045 = vadd.f32 %v1750, %v2025
    %v2046 = vadd.f32 %v1752, %v2027
    %v2047 = vadd.f32 %v1754, %v2029
    %v2048 = vadd.f32 %v1756, %v2031
    %v2049 = vadd.f32 %v1758, %v2033
    %v2058 = vperm.slane %v2042, 0
    %v2059 = vperm.slane %v2042, 1
    %v2060 = vperm.slane %v2043, 0
    %v2061 = vperm.slane %v2043, 1
    %v2062 = vperm.slane %v2044, 0
    %v2063 = vperm.slane %v2044, 1
    %v2064 = vperm.slane %v2045, 0
    %v2065 = vperm.slane %v2045, 1
    %v2066 = vperm.slane %v2046, 0
    %v2067 = vperm.slane %v2046, 1
    %v2068 = vperm.slane %v2047, 0
    %v2069 = vperm.slane %v2047, 1
    %v2070 = vperm.slane %v2048, 0
    %v2071 = vperm.slane %v2048, 1
    %v2072 = vperm.slane %v2049, 0
    %v2073 = vperm.slane %v2049, 1
    %v2090 = vpack.c.bf16 %v2058, %v2058
    %v2091 = vpack.c.bf16 %v2059, %v2059
    %v2092 = vpack.c.bf16 %v2060, %v2060
    %v2093 = vpack.c.bf16 %v2061, %v2061
    %v2094 = vpack.c.bf16 %v2062, %v2062
    %v2095 = vpack.c.bf16 %v2063, %v2063
    %v2096 = vpack.c.bf16 %v2064, %v2064
    %v2097 = vpack.c.bf16 %v2065, %v2065
    %v2098 = vpack.c.bf16 %v2066, %v2066
    %v2099 = vpack.c.bf16 %v2067, %v2067
    %v2100 = vpack.c.bf16 %v2068, %v2068
    %v2101 = vpack.c.bf16 %v2069, %v2069
    %v2102 = vpack.c.bf16 %v2070, %v2070
    %v2103 = vpack.c.bf16 %v2071, %v2071
    %v2104 = vpack.c.bf16 %v2072, %v2072
    %v2105 = vpack.c.bf16 %v2073, %v2073
    %v2122 = vunpack.c.l.b16 %v2090
    %v2123 = vunpack.c.l.b16 %v2091
    %v2124 = vunpack.c.l.b16 %v2092
    %v2125 = vunpack.c.l.b16 %v2093
    %v2126 = vunpack.c.l.b16 %v2094
    %v2127 = vunpack.c.l.b16 %v2095
    %v2128 = vunpack.c.l.b16 %v2096
    %v2129 = vunpack.c.l.b16 %v2097
    %v2130 = vunpack.c.l.b16 %v2098
    %v2131 = vunpack.c.l.b16 %v2099
    %v2132 = vunpack.c.l.b16 %v2100
    %v2133 = vunpack.c.l.b16 %v2101
    %v2134 = vunpack.c.l.b16 %v2102
    %v2135 = vunpack.c.l.b16 %v2103
    %v2136 = vunpack.c.l.b16 %v2104
    %v2137 = vunpack.c.l.b16 %v2105
    %v2138 = vrot.slane %v2124, 7
    %v2139 = vsel %vm271, %v2138, %v2122
    %v2140 = vrot.slane %v2126, 6
    %v2141 = vsel %vm274, %v2140, %v2139
    %v2142 = vrot.slane %v2128, 5
    %v2143 = vsel %vm277, %v2142, %v2141
    %v2144 = vrot.slane %v2130, 4
    %v2145 = vsel %vm280, %v2144, %v2143
    %v2146 = vrot.slane %v2132, 3
    %v2147 = vsel %vm283, %v2146, %v2145
    %v2148 = vrot.slane %v2134, 2
    %v2149 = vsel %vm286, %v2148, %v2147
    %v2150 = vrot.slane %v2136, 1
    %v2151 = vsel %vm289, %v2150, %v2149
    %v2152 = vrot.slane %v2125, 7
    %v2153 = vsel %vm271, %v2152, %v2123
    %v2154 = vrot.slane %v2127, 6
    %v2155 = vsel %vm274, %v2154, %v2153
    %v2156 = vrot.slane %v2129, 5
    %v2157 = vsel %vm277, %v2156, %v2155
    %v2158 = vrot.slane %v2131, 4
    %v2159 = vsel %vm280, %v2158, %v2157
    %v2160 = vrot.slane %v2133, 3
    %v2161 = vsel %vm283, %v2160, %v2159
    %v2162 = vrot.slane %v2135, 2
    %v2163 = vsel %vm286, %v2162, %v2161
    %v2164 = vrot.slane %v2137, 1
    %v2165 = vsel %vm289, %v2164, %v2163
    %v2166 = vpack.c.b16 %v2151, %v2151
    %v2167 = vpack.c.b16 %v2165, %v2165
    %2170 = vmatpush.bf16.msra.mxu0 %v893
    %2171 = vmatpush.bf16.msra.mxu0 %v892
    %2172 = vmatpush.bf16.msra.mxu0 %v891
    %2173 = vmatpush.bf16.msra.mxu0 %v890
    %2174 = vmatpush.bf16.msra.mxu0 %v889
    %2175 = vmatpush.bf16.msra.mxu0 %v888
    %2176 = vmatpush.bf16.msra.mxu0 %v887
    %2177 = vmatpush.bf16.msra.mxu0 %v886
    %2178 = vmatmul.bf16.gmra.mxu0 %v2166
    %v2179 = vpop.f32.mrf.mxu0
    %v2180 = vadd.f32 %v756, %v2179
    %v2181 = vpop.f32.mrf.mxu0
    %2182 = vdwg.mxu0
    %2183 = vmatpush.bf16.msra.mxu0 %v901
    %2184 = vmatpush.bf16.msra.mxu0 %v900
    %2185 = vmatpush.bf16.msra.mxu0 %v899
    %2186 = vmatpush.bf16.msra.mxu0 %v898
    %2187 = vmatpush.bf16.msra.mxu0 %v897
    %2188 = vmatpush.bf16.msra.mxu0 %v896
    %2189 = vmatpush.bf16.msra.mxu0 %v895
    %2190 = vmatpush.bf16.msra.mxu0 %v894
    %2191 = vmatmul.bf16.gmra.mxu0 %v2167
    %v2192 = vpop.f32.mrf.mxu0
    %v2193 = vadd.f32 %v2180, %v2192
    %v2194 = vpop.f32.mrf.mxu0
    %2195 = vdwg.mxu0
    %v2196 = vmax.f32 %v2193, 0.0
    %v2197 = vpack.c.bf16 %v2196, %v2196
    %2198 = vmatpush.bf16.msra.mxu0 %v1032
    %2199 = vmatpush.bf16.msra.mxu0 %v1030
    %2200 = vmatpush.bf16.msra.mxu0 %v1028
    %2201 = vmatpush.bf16.msra.mxu0 %v1026
    %2202 = vmatpush.bf16.msra.mxu0 %v1024
    %2203 = vmatpush.bf16.msra.mxu0 %v1022
    %2204 = vmatpush.bf16.msra.mxu0 %v1020
    %2205 = vmatpush.bf16.msra.mxu0 %v1018
    %2206 = vmatmul.bf16.gmra.mxu0 %v2197
    %v2207 = vpop.f32.mrf.mxu0
    %v2208 = vadd.f32 %v966, %v2207
    %v2209 = vpop.f32.mrf.mxu0
    %2210 = vdwg.mxu0
    %2211 = vmatpush.bf16.msra.mxu0 %v1033
    %2212 = vmatpush.bf16.msra.mxu0 %v1031
    %2213 = vmatpush.bf16.msra.mxu0 %v1029
    %2214 = vmatpush.bf16.msra.mxu0 %v1027
    %2215 = vmatpush.bf16.msra.mxu0 %v1025
    %2216 = vmatpush.bf16.msra.mxu0 %v1023
    %2217 = vmatpush.bf16.msra.mxu0 %v1021
    %2218 = vmatpush.bf16.msra.mxu0 %v1019
    %2219 = vmatmul.bf16.gmra.mxu0 %v2197
    %v2220 = vpop.f32.mrf.mxu0
    %v2221 = vadd.f32 %v967, %v2220
    %v2222 = vpop.f32.mrf.mxu0
    %2223 = vdwg.mxu0
    %v2224 = vxor.u32 %v2208, 2147483648
    %v2225 = vxor.u32 %v2221, 2147483648
    %v2226 = vmul.f32 %v2224, 1.442695
    %v2227 = vpow.pop %v2226
    %v2228 = vmul.f32 %v2225, 1.442695
    %v2229 = vpow.pop %v2228
    %v2230 = vadd.f32 %v2227, 1.0
    %v2231 = vadd.f32 %v2229, 1.0
    %v2232 = vrcp.pop %v2230
    %v2233 = vmul.f32 %v2230, %v2232
    %v2234 = vsub.f32 1.0, %v2233
    %v2235 = vmul.f32 %v2232, %v2234
    %v2236 = vadd.f32 %v2232, %v2235
    %vm2237 = vweird.f32 %v2230
    %vm2238 = vweird.f32 %v2232
    %vm2239 = vmor %vm2237, %vm2238
    %v2240 = vsel %vm2239, %v2232, %v2236
    %v2241 = vand.u32 2147483647, %v2230
    %vm2242 = vcmp.eq.f32.partialorder %v2241, 8.507059e+37
    %v2243 = vand.u32 %v2230, 2147483648
    %v2244 = vor.u32 1.1754944e-38, %v2243
    %v2245 = vsel %vm2242, %v2244, %v2240
    %v2246 = vmul.f32 1.0, %v2245
    %v2247 = vrcp.pop %v2231
    %v2248 = vmul.f32 %v2231, %v2247
    %v2249 = vsub.f32 1.0, %v2248
    %v2250 = vmul.f32 %v2247, %v2249
    %v2251 = vadd.f32 %v2247, %v2250
    %vm2252 = vweird.f32 %v2231
    %vm2253 = vweird.f32 %v2247
    %vm2254 = vmor %vm2252, %vm2253
    %v2255 = vsel %vm2254, %v2247, %v2251
    %v2256 = vand.u32 2147483647, %v2231
    %vm2257 = vcmp.eq.f32.partialorder %v2256, 8.507059e+37
    %v2258 = vand.u32 %v2231, 2147483648
    %v2259 = vor.u32 1.1754944e-38, %v2258
    %v2260 = vsel %vm2257, %v2259, %v2255
    %v2261 = vmul.f32 1.0, %v2260
    %2262 = vst [vmem:[#allocation1] ss:$9 sm:$0xff] %v1759
    %s2263 = scalar_lea.vmem [#allocation1], 1
    %2264 = vst [vmem:[%s2263] ss:$9 sm:$0xff] %v1760
    %s2265 = scalar_lea.vmem [#allocation1], 2
    %2266 = vst [vmem:[%s2265] ss:$9 sm:$0xff] %v1761
    %s2267 = scalar_lea.vmem [#allocation1], 3
    %2268 = vst [vmem:[%s2267] ss:$9 sm:$0xff] %v1762
    %s2269 = scalar_lea.vmem [#allocation1], 4
    %2270 = vst [vmem:[%s2269] ss:$9 sm:$0xff] %v1763
    %s2271 = scalar_lea.vmem [#allocation1], 5
    %2272 = vst [vmem:[%s2271] ss:$9 sm:$0xff] %v1764
    %s2273 = scalar_lea.vmem [#allocation1], 6
    %2274 = vst [vmem:[%s2273] ss:$9 sm:$0xff] %v1765
    %s2275 = scalar_lea.vmem [#allocation1], 7
    %2276 = vst [vmem:[%s2275] ss:$9 sm:$0xff] %v1766
    %v2277 = vld [vmem:[#allocation1] sm:$0xff]
    %v2278 = vld [vmem:[#allocation1 + $0x9] sm:$0xff]
    %v2281 = vmul.f32 %v2246, %v2277
    %v2282 = vmul.f32 %v2261, %v2278
    %v2285 = vrot.slane %v2282, 7
    %v2286 = vsel %vm631, %v2281, %v2285
    %v2287 = vsel %vm271, %v2281, %v2285
    %v2288 = vrot.slane %v2287, 1
    %v2289 = vsel %vm274, %v2281, %v2285
    %v2290 = vrot.slane %v2289, 2
    %v2291 = vsel %vm277, %v2281, %v2285
    %v2292 = vrot.slane %v2291, 3
    %v2293 = vsel %vm280, %v2281, %v2285
    %v2294 = vrot.slane %v2293, 4
    %v2295 = vsel %vm283, %v2281, %v2285
    %v2296 = vrot.slane %v2295, 5
    %v2297 = vsel %vm286, %v2281, %v2285
    %v2298 = vrot.slane %v2297, 6
    %v2299 = vsel %vm645, %v2285, %v2281
    %v2300 = vrot.slane %v2299, 7
    %v2309 = vadd.f32 %v1744, %v2286
    %v2310 = vadd.f32 %v1746, %v2288
    %v2311 = vadd.f32 %v1748, %v2290
    %v2312 = vadd.f32 %v1750, %v2292
    %v2313 = vadd.f32 %v1752, %v2294
    %v2314 = vadd.f32 %v1754, %v2296
    %v2315 = vadd.f32 %v1756, %v2298
    %v2316 = vadd.f32 %v1758, %v2300
    %2325 = vst [vmem:[#allocation1] ss:$9 sm:$0xff] %v2309
    %s2326 = scalar_lea.vmem [#allocation1], 1
    %2327 = vst [vmem:[%s2326] ss:$9 sm:$0xff] %v2310
    %s2328 = scalar_lea.vmem [#allocation1], 2
    %2329 = vst [vmem:[%s2328] ss:$9 sm:$0xff] %v2311
    %s2330 = scalar_lea.vmem [#allocation1], 3
    %2331 = vst [vmem:[%s2330] ss:$9 sm:$0xff] %v2312
    %s2332 = scalar_lea.vmem [#allocation1], 4
    %2333 = vst [vmem:[%s2332] ss:$9 sm:$0xff] %v2313
    %s2334 = scalar_lea.vmem [#allocation1], 5
    %2335 = vst [vmem:[%s2334] ss:$9 sm:$0xff] %v2314
    %s2336 = scalar_lea.vmem [#allocation1], 6
    %2337 = vst [vmem:[%s2336] ss:$9 sm:$0xff] %v2315
    %s2338 = scalar_lea.vmem [#allocation1], 7
    %2339 = vst [vmem:[%s2338] ss:$9 sm:$0xff] %v2316
    %v2340 = vld [vmem:[#allocation1] sm:$0xff]
    %v2341 = vld [vmem:[#allocation1 + $0x9] sm:$0xff]
    %2344 = vst [vmem:[#allocation11] sm:$0xff] %v2340
    %2345 = vst [vmem:[#allocation11 + $0x8] sm:$0xff] %v2341
    // Predicated region
    $region42: #{tpu_custom_call.1} parent=1 // pred_check
      _
    $region43: #{tpu_custom_call.1} parent=1 // pred_check_branch
      %2347 = sbr.rel (0) target = $region45
    $region44: #{tpu_custom_call.1} parent=1 // pred_region
      %2349 = vsyncadd [#allocation4], 0
      %s2351 = sshll.u32 [#allocation11], 4
      %s2352 = int_to_ptr.vmem [resolvable:$true] %s2351
      %s2353 = sshll.u32 %s5, 4
      %s2354 = int_to_ptr.hbm [resolvable:$true] %s2353
      %2356 = dma.vmem_to_hbm [thread:$0]  %s2352, 256, %s2354, [#allocation4]
    $region45: #{tpu_custom_call.1} parent=1 // pred_fallthru
      _
    // Predicated region
    $region46: #{tpu_custom_call.1} parent=1 // pred_check
      _
    $region47: #{tpu_custom_call.1} parent=1 // pred_check_branch
      %2358 = sbr.rel (0) target = $region49
    $region48: #{tpu_custom_call.1} parent=1 // pred_region
      %2360 = dma.done [#allocation4], 256
    $region49: #{tpu_custom_call.1} parent=1 // pred_fallthru
      _
    %2361 = vsyncpa [#allocation3], 1
    %2362 = vsyncpa [#allocation6], 1
    %2363 = vsyncpa [#allocation9], 1
    %2364 = vsyncpa [#allocation4], 1

</llo_original>
